<compile_context>
chip_gen: v7x
topology: tpu7x:2x2x1
jax: 0.10.0
libtpu: 0.0.40
codegen_flags: <defaults>
</compile_context>

<pallas_src>
import numpy as np
import jax
import jax.numpy as jnp
from jax.experimental import pallas as pl
from jax.experimental.pallas import tpu as pltpu


# ----------------------------------------------------------------------------
# Dense layer kernel
# ----------------------------------------------------------------------------
def _make_linear_kernel(compute_dtype):
    def _kernel(x_ref, w_ref, b_ref, o_ref):
        x = x_ref[...].astype(compute_dtype)
        w = w_ref[...].astype(compute_dtype)
        o_ref[...] = (
            jnp.dot(x, w, preferred_element_type=jnp.float32) + b_ref[...]
        ).astype(o_ref.dtype)
    return _kernel


def linear(x, w, b, compute_dtype=jnp.float32, block_m=512):
    """x: (M, K), w: (K, N), b: (1, N) -> (M, N) float32.

    For large M (production shapes) an M-tiled grid is used so inputs are
    double-buffered instead of pulling everything into VMEM at once.
    """
    M, K = x.shape
    _, N = w.shape
    kernel = _make_linear_kernel(compute_dtype)
    if M <= block_m or M % block_m != 0:
        return pl.pallas_call(
            kernel,
            out_shape=jax.ShapeDtypeStruct((M, N), jnp.float32),
        )(x, w, b)
    return pl.pallas_call(
        kernel,
        out_shape=jax.ShapeDtypeStruct((M, N), jnp.float32),
        grid=(M // block_m,),
        in_specs=[
            pl.BlockSpec((block_m, K), lambda i: (i, 0)),
            pl.BlockSpec((K, N), lambda i: (0, 0)),
            pl.BlockSpec((1, N), lambda i: (0, 0)),
        ],
        out_specs=pl.BlockSpec((block_m, N), lambda i: (i, 0)),
        compiler_params=pltpu.CompilerParams(
            dimension_semantics=("parallel",)
        ),
    )(x, w, b)


# ----------------------------------------------------------------------------
# Bidirectional LSTM: one kernel, grid = (direction, time), fused 4H gates
# ----------------------------------------------------------------------------
def _bilstm_kernel(x_ref, wih_ref, whh_ref, b_ref, out_ref, h_scr, c_scr):
    t = pl.program_id(1)

    @pl.when(t == 0)
    def _():
        h_scr[...] = jnp.zeros_like(h_scr)
        c_scr[...] = jnp.zeros_like(c_scr)

    x = x_ref[...]          # (B, nIn)
    h = h_scr[...]          # (B, H)
    c = c_scr[...]          # (B, H)
    H = h.shape[-1]

    # Fused gates: (B, 4H) = x @ Wih + h @ Whh + b,   gate order [i|f|g|o]
    gates = (
        jnp.dot(x, wih_ref[...], preferred_element_type=jnp.float32)
        + jnp.dot(h, whh_ref[...], preferred_element_type=jnp.float32)
        + b_ref[...]
    )
    i = jax.nn.sigmoid(gates[:, 0 * H:1 * H])
    f = jax.nn.sigmoid(gates[:, 1 * H:2 * H])
    g = jnp.tanh(gates[:, 2 * H:3 * H])
    o = jax.nn.sigmoid(gates[:, 3 * H:4 * H])
    c_new = f * c + i * g
    h_new = o * jnp.tanh(c_new)
    h_scr[...] = h_new
    c_scr[...] = c_new
    out_ref[...] = h_new


def bidirectional_lstm(x_seq, p):
    """x_seq: (T, B, nIn); p['wih']: (2, nIn, 4H); p['whh']: (2, H, 4H);
    p['b']: (2, 1, 4H); direction 0 = forward, 1 = backward."""
    T, B, nIn = x_seq.shape
    H = p["whh"].shape[1]
    x2 = jnp.stack([x_seq, x_seq[::-1]], axis=0)          # (2, T, B, nIn)

    out2 = pl.pallas_call(
        _bilstm_kernel,
        out_shape=jax.ShapeDtypeStruct((2, T, B, H), jnp.float32),
        grid=(2, T),
        in_specs=[
            pl.BlockSpec((None, None, B, nIn), lambda d, t: (d, t, 0, 0)),
            pl.BlockSpec((None, nIn, 4 * H), lambda d, t: (d, 0, 0)),
            pl.BlockSpec((None, H, 4 * H), lambda d, t: (d, 0, 0)),
            pl.BlockSpec((None, 1, 4 * H), lambda d, t: (d, 0, 0)),
        ],
        out_specs=pl.BlockSpec((None, None, B, H), lambda d, t: (d, t, 0, 0)),
        scratch_shapes=[
            pltpu.VMEM((B, H), jnp.float32),
            pltpu.VMEM((B, H), jnp.float32),
        ],
        compiler_params=pltpu.CompilerParams(
            dimension_semantics=("parallel", "arbitrary")
        ),
    )(x2, p["wih"], p["whh"], p["b"])

    fwd = out2[0]
    bwd = out2[1][::-1]
    rec = jnp.concatenate([fwd, bwd], axis=-1)             # (T, B, 2H)
    out = linear(rec.reshape(T * B, 2 * H), p["emb_w"], p["emb_b"])
    return out.reshape(T, B, -1)


# ----------------------------------------------------------------------------
# Attention decoder: one kernel, grid = (decoder, step), hidden in VMEM scratch
# ----------------------------------------------------------------------------
def _attn_decode_kernel(
    feats_ref, fproj_ref, emb_ref,
    wh_ref, bh_ref, ws_ref,
    wih_c_ref, wih_e_ref, whh_ref, bih_ref, bhh_ref,
    hout_ref, h_scr,
):
    step = pl.program_id(1)

    @pl.when(step == 0)
    def _():
        h_scr[...] = jnp.zeros_like(h_scr)

    feats = feats_ref[...]          # (T, B, C)  shared by both decoders
    fproj = fproj_ref[...]          # (T, B, H)  hoisted i2h(feats) for this decoder
    emb = emb_ref[...]              # (B, E)     pre-gathered char embedding
    hprev = h_scr[...]              # (B, H)
    H = hprev.shape[-1]

    # prev_hidden_proj = h2h(prev_hidden)
    hproj = (
        jnp.dot(hprev, wh_ref[...], preferred_element_type=jnp.float32)
        + bh_ref[...]
    )                               # (B, H)

    # emission over time: score(tanh(i2h(feats) + hproj)), score as a lane reduce
    a = jnp.tanh(fproj + hproj[None, :, :])                 # (T, B, H)
    e = jnp.sum(a * ws_ref[...], axis=-1)                   # (T, B)

    # alpha = softmax over time (dim 0), fracPickup treated as identity
    m = jnp.max(e, axis=0, keepdims=True)
    ex = jnp.exp(e - m)
    alpha = ex * pl.reciprocal(jnp.sum(ex, axis=0, keepdims=True), approx=True)

    # context = sum_t alpha[t] * feats[t]
    context = jnp.sum(alpha[:, :, None] * feats, axis=0)    # (B, C)

    # GRU cell on [context, cur_embeddings] with prev_hidden; fused 3H gates [r|z|n]
    gx = (
        jnp.dot(context, wih_c_ref[...], preferred_element_type=jnp.float32)
        + jnp.dot(emb, wih_e_ref[...], preferred_element_type=jnp.float32)
        + bih_ref[...]
    )                               # (B, 3H)
    gh = (
        jnp.dot(hprev, whh_ref[...], preferred_element_type=jnp.float32)
        + bhh_ref[...]
    )                               # (B, 3H)
    r = jax.nn.sigmoid(gx[:, 0 * H:1 * H] + gh[:, 0 * H:1 * H])
    z = jax.nn.sigmoid(gx[:, 1 * H:2 * H] + gh[:, 1 * H:2 * H])
    n = jnp.tanh(gx[:, 2 * H:3 * H] + r * gh[:, 2 * H:3 * H])
    h_new = (1.0 - z) * n + z * hprev

    h_scr[...] = h_new
    hout_ref[...] = h_new


def attention_decode(feats, feats_proj2, emb2, p2, num_steps):
    """Runs both decoders (l2r, r2l) for all steps in one pallas_call.

    feats: (T, B, C); feats_proj2: (2, T, B, H); emb2: (2, num_steps, B, E).
    Returns output hiddens (2, num_steps, B, H)."""
    T, B, C = feats.shape
    H = p2["wh"].shape[-1]
    E = emb2.shape[-1]
    return pl.pallas_call(
        _attn_decode_kernel,
        out_shape=jax.ShapeDtypeStruct((2, num_steps, B, H), jnp.float32),
        grid=(2, num_steps),
        in_specs=[
            pl.BlockSpec((T, B, C), lambda d, i: (0, 0, 0)),
            pl.BlockSpec((None, T, B, H), lambda d, i: (d, 0, 0, 0)),
            pl.BlockSpec((None, None, B, E), lambda d, i: (d, i, 0, 0)),
            pl.BlockSpec((None, H, H), lambda d, i: (d, 0, 0)),
            pl.BlockSpec((None, 1, H), lambda d, i: (d, 0, 0)),
            pl.BlockSpec((None, 1, H), lambda d, i: (d, 0, 0)),
            pl.BlockSpec((None, C, 3 * H), lambda d, i: (d, 0, 0)),
            pl.BlockSpec((None, E, 3 * H), lambda d, i: (d, 0, 0)),
            pl.BlockSpec((None, H, 3 * H), lambda d, i: (d, 0, 0)),
            pl.BlockSpec((None, 1, 3 * H), lambda d, i: (d, 0, 0)),
            pl.BlockSpec((None, 1, 3 * H), lambda d, i: (d, 0, 0)),
        ],
        out_specs=pl.BlockSpec((None, None, B, H), lambda d, i: (d, i, 0, 0)),
        scratch_shapes=[pltpu.VMEM((B, H), jnp.float32)],
        compiler_params=pltpu.CompilerParams(
            dimension_semantics=("parallel", "arbitrary")
        ),
    )(
        feats, feats_proj2, emb2,
        p2["wh"], p2["bh"], p2["ws"],
        p2["wih_c"], p2["wih_e"], p2["whh"], p2["bih"], p2["bhh"],
    )


# ----------------------------------------------------------------------------
# Module wrappers (glue in plain JAX / Python)
# ----------------------------------------------------------------------------
def backbone(images, w_proj, b_proj, patch_w):
    """Stand-in for se_resnet50: patchify width, project to 2048 channels."""
    b, nc, Hh, W = images.shape
    T = W // patch_w
    x = images.reshape(b, nc, Hh, T, patch_w)
    x = jnp.transpose(x, (3, 0, 1, 2, 4)).reshape(T, b, nc * Hh * patch_w)
    feat = linear(
        x.reshape(T * b, nc * Hh * patch_w), w_proj, b_proj,
        compute_dtype=jnp.bfloat16,   # big matmul -> bf16 operands, f32 accumulate
    )
    return feat.reshape(T, b, -1)     # (T, B, 2048)


def _build_targets(text_length, text, num_steps):
    """(num_steps+1, B) int32 targets, labels shifted by +1, host-side like torch."""
    B = len(text_length)
    targets = np.zeros((B, num_steps + 1), dtype=np.int32)
    start = 0
    for i in range(B):
        L = int(text_length[i])
        targets[i, 1:1 + L] = np.asarray(text[start:start + L], dtype=np.int32) + 1
        start += L
    return targets.T


def attention_forward_both(feats, text_length, text, text_rev, p2):
    """Training path of Attention (test=False) for the l2r and r2l decoders."""
    T, B, C = feats.shape
    H = p2["wh"].shape[-1]
    num_steps = int(max(text_length))

    tgt_l2r = _build_targets(text_length, text, num_steps)[:num_steps]
    tgt_r2l = _build_targets(text_length, text_rev, num_steps)[:num_steps]

    # Pre-gather char embeddings for all steps of both decoders: (2, S, B, E)
    emb2 = jnp.stack(
        [p2["char_emb"][0][jnp.asarray(tgt_l2r)],
         p2["char_emb"][1][jnp.asarray(tgt_r2l)]],
        axis=0,
    )

    # Hoisted i2h(feats) for both decoders in one matmul: (T*B, 2H) -> (2, T, B, H)
    wi_cat = jnp.concatenate([p2["wi"][0], p2["wi"][1]], axis=1)     # (C, 2H)
    fp = linear(feats.reshape(T * B, C), wi_cat, jnp.zeros((1, 2 * H), jnp.float32))
    fp = fp.reshape(T, B, 2 * H)
    feats_proj2 = jnp.stack([fp[..., :H], fp[..., H:]], axis=0)      # (2, T, B, H)

    oh2 = attention_decode(feats, feats_proj2, emb2, p2, num_steps)  # (2, S, B, H)

    nclass = p2["nclass"]

    def gen_probs(d):
        pieces = [oh2[d, : int(text_length[b]), b, :] for b in range(B)]
        new_h = jnp.concatenate(pieces, axis=0)                      # (num_labels, H)
        full = linear(new_h, p2["gen_w"][d], p2["gen_b"][d])         # lane-padded N
        return full[:, :nclass]

    return gen_probs(0), gen_probs(1)


def asrn_forward(params, images, length, text, text_rev):
    feats = backbone(images, params["bb_w"], params["bb_b"], params["patch_w"])
    rnn1 = bidirectional_lstm(feats, params["blstm1"])
    rnn2 = bidirectional_lstm(rnn1, params["blstm2"])
    return attention_forward_both(rnn2, length, text, text_rev, params["attn"])


# ----------------------------------------------------------------------------
# Deterministic parameter initialization
# ----------------------------------------------------------------------------
def make_asrn_params(key, nc, imgH, patch_w, nh, nclass, num_emb, feat_c=2048):
    keys = iter(jax.random.split(key, 64))

    def nrm(shape, scale=0.1):
        return scale * jax.random.normal(next(keys), shape, dtype=jnp.float32)

    def blstm_params(n_in, n_hidden, n_out):
        # Fused LSTM gates along the output dim: [i|f|g|o]; dir 0 = fwd, 1 = bwd.
        # b corresponds to PyTorch's (b_ih + b_hh).
        return dict(
            wih=nrm((2, n_in, 4 * n_hidden)),
            whh=nrm((2, n_hidden, 4 * n_hidden)),
            b=nrm((2, 1, 4 * n_hidden)),
            emb_w=nrm((2 * n_hidden, n_out)),
            emb_b=nrm((1, n_out)),
        )

    # Generator output padded to a multiple of 128 lanes; real columns = nclass.
    npad = ((nclass + 127) // 128) * 128
    gen_w = jnp.zeros((2, nh, npad), jnp.float32).at[:, :, :nclass].set(
        nrm((2, nh, nclass)))
    gen_b = jnp.zeros((2, 1, npad), jnp.float32).at[:, :, :nclass].set(
        nrm((2, 1, nclass)))

    # Attention params for both decoders stacked on a leading axis (0=l2r, 1=r2l).
    attn = dict(
        wi=nrm((2, nh, nh)),                 # i2h (no bias)
        wh=nrm((2, nh, nh)),                 # h2h
        bh=nrm((2, 1, nh)),
        ws=nrm((2, 1, nh)),                  # score weight as a row vector
        wih_c=nrm((2, nh, 3 * nh)),          # GRU W_ih (context part), gates [r|z|n]
        wih_e=nrm((2, num_emb, 3 * nh)),     # GRU W_ih (embedding part)
        whh=nrm((2, nh, 3 * nh)),            # GRU W_hh
        bih=nrm((2, 1, 3 * nh)),
        bhh=nrm((2, 1, 3 * nh)),
        gen_w=gen_w,
        gen_b=gen_b,
        char_emb=nrm((2, nclass + 1, num_emb), 1.0),
        nclass=nclass,
    )

    return dict(
        patch_w=patch_w,
        bb_w=nrm((nc * imgH * patch_w, feat_c), 0.02),
        bb_b=nrm((1, feat_c)),
        blstm1=blstm_params(feat_c, nh, nh),
        blstm2=blstm_params(nh, nh, nh),
        attn=attn,
    )


# ----------------------------------------------------------------------------
if __name__ == "__main__":
    key = jax.random.PRNGKey(0)
    k_param, k_img = jax.random.split(key)

    # Small ASRN config: imgH=32 (multiple of 16), nc=1, nclass=10, nh=32
    nc, imgH, imgW = 1, 32, 64
    B = 2
    nh = 32
    nclass = 10
    num_emb = 256          # ASRN uses Attention(..., 256)
    patch_w = 8            # -> T = imgW // patch_w = 8 timesteps

    params = make_asrn_params(k_param, nc, imgH, patch_w, nh, nclass, num_emb)

    images = jax.random.normal(k_img, (B, nc, imgH, imgW), dtype=jnp.float32)

    # text_length per batch element; text is the concatenated 0-based labels.
    length = [3, 5]                                  # num_steps = 5, num_labels = 8
    text = [1, 4, 2, 0, 3, 5, 7, 2]
    # reversed per-sample labels (for the R2L decoder)
    text_rev = []
    start = 0
    for L in length:
        text_rev.extend(list(reversed(text[start:start + L])))
        start += L

    out_l2r, out_r2l = asrn_forward(params, images, length, text, text_rev)
    jax.block_until_ready((out_l2r, out_r2l))

    assert out_l2r.shape == (sum(length), nclass)
    assert out_r2l.shape == (sum(length), nclass)
    print("KERNEL_OK")
</pallas_src>

<mosaic_0001>
module attributes {stable_mosaic.version = 11 : i64} {
  func.func @_kernel(%arg0: memref<16x256xf32, #tpu.memory_space<vmem>>, %arg1: memref<256x2048xf32, #tpu.memory_space<vmem>>, %arg2: memref<1x2048xf32, #tpu.memory_space<vmem>>, %arg3: memref<16x2048xf32, #tpu.memory_space<vmem>>) attributes {dimension_semantics = [], scalar_prefetch = 0 : i64, scratch_operands = 0 : i64, tpu.core_type = #tpu.core_type<tc>} {
    %c0 = arith.constant 0 : index
    %c0_0 = arith.constant 0 : index
    %0 = vector.load %arg0[%c0, %c0_0] : memref<16x256xf32, #tpu.memory_space<vmem>>, vector<16x256xf32>
    %1 = arith.truncf %0 : vector<16x256xf32> to vector<16x256xbf16>
    %c0_1 = arith.constant 0 : index
    %c0_2 = arith.constant 0 : index
    %2 = vector.load %arg1[%c0_1, %c0_2] : memref<256x2048xf32, #tpu.memory_space<vmem>>, vector<256x2048xf32>
    %3 = arith.truncf %2 : vector<256x2048xf32> to vector<256x2048xbf16>
    %cst = arith.constant dense<0.000000e+00> : vector<16x2048xf32>
    %4 = tpu.matmul %1, %3, %cst {dimension_numbers = #tpu.dot_dimension_numbers<[1], [0], [0], [1], [0, 0, 1, 1], [], []>} : vector<16x256xbf16>, vector<256x2048xbf16>, vector<16x2048xf32> -> vector<16x2048xf32>
    %c0_3 = arith.constant 0 : index
    %c0_4 = arith.constant 0 : index
    %5 = vector.load %arg2[%c0_3, %c0_4] : memref<1x2048xf32, #tpu.memory_space<vmem>>, vector<1x2048xf32>
    %6 = vector.broadcast %5 : vector<1x2048xf32> to vector<16x2048xf32>
    %7 = arith.addf %4, %6 : vector<16x2048xf32>
    %c0_5 = arith.constant 0 : index
    %c0_6 = arith.constant 0 : index
    %8 = vector.load %arg3[%c0_5, %c0_6] : memref<16x2048xf32, #tpu.memory_space<vmem>>, vector<16x2048xf32>
    tpu.vector_store %arg3[%c0_5, %c0_6], %7 {strides = array<i32>} : memref<16x2048xf32, #tpu.memory_space<vmem>>, vector<16x2048xf32>,
    return
  }
}

</mosaic_0001>

<llo_original>
// kernel: tpu_custom_call.1
$region0: #{tpu_custom_call.1}
  #allocation0 [shape = 'u32[]', space=smem, size = 0x4, offset = 0x4, fixed_abs, tag = 'smem constant byte address 0x4 - core index']
  #allocation1 [shape = 'u32[144,128]{1,0:T(1,128)}', space=vmem, size = 0x12000, scoped, tag = 'internal scratch']
  %s0 = inlined_call_operand.hbm [shape: f32[16,256], index: 0, kind: input, shape index: {}]
  %s1 = inlined_call_operand.hbm [shape: f32[256,2048], index: 1, kind: input, shape index: {}]
  %s2 = inlined_call_operand.hbm [shape: f32[1,2048], index: 2, kind: input, shape index: {}]
  %s3 = inlined_call_operand.hbm [shape: f32[16,2048], index: 3, kind: output, shape index: {}]
  %s4 = sld [smem:[#allocation0]]
  $region34: #{tpu_custom_call.1} parent=0
    _
  %s6 = ssub.s32 1, %s4
  %s7 = scalar_select 0, %s6, %s4
  $region1: #{tpu_custom_call.1} parent=0
    #allocation2 [shape = 'u8[16384]{0}', space=vmem, size = 0x4000, scoped, tag = 'input window, operand 0, single buffered']
    #allocation3 [shape = 's32[1]{0}', space=sflag, size = 0x4, scoped, tag = 'scoped memory for tpu_custom_call.1']
    #allocation4 [shape = 's32[1]{0}', space=sflag, size = 0x4, scoped, tag = 'scoped memory for tpu_custom_call.1']
    #allocation5 [shape = 'u8[2097152]{0}', space=vmem, size = 0x200000, scoped, tag = 'input window, operand 1, single buffered']
    #allocation6 [shape = 's32[1]{0}', space=sflag, size = 0x4, scoped, tag = 'scoped memory for tpu_custom_call.1']
    #allocation7 [shape = 'u8[8192]{0}', space=vmem, size = 0x2000, scoped, tag = 'input window, operand 2, single buffered']
    #allocation8 [shape = 'u8[131072]{0}', space=vmem, size = 0x20000, scoped, tag = 'output window, operand 0, single buffered']
    %8 = vsyncpa [#allocation3], 0
    %9 = vsyncpa [#allocation6], 0
    %10 = vsyncpa [#allocation4], 0
    // Predicated region
    $region2: #{tpu_custom_call.1} parent=1 // pred_check
      _
    $region3: #{tpu_custom_call.1} parent=1 // pred_check_branch
      %12 = sbr.rel (0) target = $region5
    $region4: #{tpu_custom_call.1} parent=1 // pred_region
      %s14 = ssub.s32 512, 512
      %15 = vsyncadd [#allocation3], %s14
      %s16 = sshll.u32 [#allocation2], 4
      %s17 = int_to_ptr.vmem [resolvable:$true] %s16
      %22 = dma.hbm_to_vmem [thread:$0]  %s0, 512, %s17, [#allocation3], 256, 256, 16
    $region5: #{tpu_custom_call.1} parent=1 // pred_fallthru
      _
    // Predicated region
    $region6: #{tpu_custom_call.1} parent=1 // pred_check
      _
    $region7: #{tpu_custom_call.1} parent=1 // pred_check_branch
      %24 = sbr.rel (0) target = $region9
    $region8: #{tpu_custom_call.1} parent=1 // pred_region
      %s26 = ssub.s32 65536, 65536
      %27 = vsyncadd [#allocation6], %s26
      %s28 = sshll.u32 [#allocation5], 4
      %s29 = int_to_ptr.vmem [resolvable:$true] %s28
      %34 = dma.hbm_to_vmem [thread:$0]  %s1, 65536, %s29, [#allocation6], 2048, 2048, 128
    $region9: #{tpu_custom_call.1} parent=1 // pred_fallthru
      _
    // Predicated region
    $region10: #{tpu_custom_call.1} parent=1 // pred_check
      _
    $region11: #{tpu_custom_call.1} parent=1 // pred_check_branch
      %36 = sbr.rel (0) target = $region13
    $region12: #{tpu_custom_call.1} parent=1 // pred_region
      %s38 = ssub.s32 256, 256
      %39 = vsyncadd [#allocation6], %s38
      %s41 = sshll.u32 [#allocation7], 4
      %s42 = int_to_ptr.vmem [resolvable:$true] %s41
      %44 = dma.hbm_to_vmem [thread:$0]  %s2, 256, %s42, [#allocation6]
    $region13: #{tpu_custom_call.1} parent=1 // pred_fallthru
      _
    // Predicated region
    $region14: #{tpu_custom_call.1} parent=1 // pred_check
      _
    $region15: #{tpu_custom_call.1} parent=1 // pred_check_branch
      %46 = sbr.rel (0) target = $region17
    $region16: #{tpu_custom_call.1} parent=1 // pred_region
      %47 = dma.done [#allocation3], 512
    $region17: #{tpu_custom_call.1} parent=1 // pred_fallthru
      _
    // Predicated region
    $region18: #{tpu_custom_call.1} parent=1 // pred_check
      _
    $region19: #{tpu_custom_call.1} parent=1 // pred_check_branch
      %49 = sbr.rel (0) target = $region21
    $region20: #{tpu_custom_call.1} parent=1 // pred_region
      %50 = dma.done [#allocation6], 65536
    $region21: #{tpu_custom_call.1} parent=1 // pred_fallthru
      _
    // Predicated region
    $region22: #{tpu_custom_call.1} parent=1 // pred_check
      _
    $region23: #{tpu_custom_call.1} parent=1 // pred_check_branch
      %52 = sbr.rel (0) target = $region25
    $region24: #{tpu_custom_call.1} parent=1 // pred_region
      %53 = dma.done [#allocation6], 256
    $region25: #{tpu_custom_call.1} parent=1 // pred_fallthru
      _
    %v54 = vld [vmem:[#allocation2] sm:$0xff]
    %v55 = vld [vmem:[#allocation2 + $0x8] sm:$0xff]
    %v56 = vld [vmem:[#allocation2 + $0x10] sm:$0xff]
    %v57 = vld [vmem:[#allocation2 + $0x18] sm:$0xff]
    %v58 = vpack.c.bf16 %v56, %v54
    %v59 = vpack.c.bf16 %v57, %v55
    %v60 = vld [vmem:[#allocation5] sm:$0xff]
    %v61 = vld [vmem:[#allocation5 + $0x8] sm:$0xff]
    %v62 = vld [vmem:[#allocation5 + $0x10] sm:$0xff]
    %v63 = vld [vmem:[#allocation5 + $0x18] sm:$0xff]
    %v64 = vld [vmem:[#allocation5 + $0x20] sm:$0xff]
    %v65 = vld [vmem:[#allocation5 + $0x28] sm:$0xff]
    %v66 = vld [vmem:[#allocation5 + $0x30] sm:$0xff]
    %v67 = vld [vmem:[#allocation5 + $0x38] sm:$0xff]
    %v68 = vld [vmem:[#allocation5 + $0x40] sm:$0xff]
    %v69 = vld [vmem:[#allocation5 + $0x48] sm:$0xff]
    %v70 = vld [vmem:[#allocation5 + $0x50] sm:$0xff]
    %v71 = vld [vmem:[#allocation5 + $0x58] sm:$0xff]
    %v72 = vld [vmem:[#allocation5 + $0x60] sm:$0xff]
    %v73 = vld [vmem:[#allocation5 + $0x68] sm:$0xff]
    %v74 = vld [vmem:[#allocation5 + $0x70] sm:$0xff]
    %v75 = vld [vmem:[#allocation5 + $0x78] sm:$0xff]
    %v76 = vld [vmem:[#allocation5 + $0x80] sm:$0xff]
    %v77 = vld [vmem:[#allocation5 + $0x88] sm:$0xff]
    %v78 = vld [vmem:[#allocation5 + $0x90] sm:$0xff]
    %v79 = vld [vmem:[#allocation5 + $0x98] sm:$0xff]
    %v80 = vld [vmem:[#allocation5 + $0xa0] sm:$0xff]
    %v81 = vld [vmem:[#allocation5 + $0xa8] sm:$0xff]
    %v82 = vld [vmem:[#allocation5 + $0xb0] sm:$0xff]
    %v83 = vld [vmem:[#allocation5 + $0xb8] sm:$0xff]
    %v84 = vld [vmem:[#allocation5 + $0xc0] sm:$0xff]
    %v85 = vld [vmem:[#allocation5 + $0xc8] sm:$0xff]
    %v86 = vld [vmem:[#allocation5 + $0xd0] sm:$0xff]
    %v87 = vld [vmem:[#allocation5 + $0xd8] sm:$0xff]
    %v88 = vld [vmem:[#allocation5 + $0xe0] sm:$0xff]
    %v89 = vld [vmem:[#allocation5 + $0xe8] sm:$0xff]
    %v90 = vld [vmem:[#allocation5 + $0xf0] sm:$0xff]
    %v91 = vld [vmem:[#allocation5 + $0xf8] sm:$0xff]
    %v92 = vld [vmem:[#allocation5 + $0x100] sm:$0xff]
    %v93 = vld [vmem:[#allocation5 + $0x108] sm:$0xff]
    %v94 = vld [vmem:[#allocation5 + $0x110] sm:$0xff]
    %v95 = vld [vmem:[#allocation5 + $0x118] sm:$0xff]
    %v96 = vld [vmem:[#allocation5 + $0x120] sm:$0xff]
    %v97 = vld [vmem:[#allocation5 + $0x128] sm:$0xff]
    %v98 = vld [vmem:[#allocation5 + $0x130] sm:$0xff]
    %v99 = vld [vmem:[#allocation5 + $0x138] sm:$0xff]
    %v100 = vld [vmem:[#allocation5 + $0x140] sm:$0xff]
    %v101 = vld [vmem:[#allocation5 + $0x148] sm:$0xff]
    %v102 = vld [vmem:[#allocation5 + $0x150] sm:$0xff]
    %v103 = vld [vmem:[#allocation5 + $0x158] sm:$0xff]
    %v104 = vld [vmem:[#allocation5 + $0x160] sm:$0xff]
    %v105 = vld [vmem:[#allocation5 + $0x168] sm:$0xff]
    %v106 = vld [vmem:[#allocation5 + $0x170] sm:$0xff]
    %v107 = vld [vmem:[#allocation5 + $0x178] sm:$0xff]
    %v108 = vld [vmem:[#allocation5 + $0x180] sm:$0xff]
    %v109 = vld [vmem:[#allocation5 + $0x188] sm:$0xff]
    %v110 = vld [vmem:[#allocation5 + $0x190] sm:$0xff]
    %v111 = vld [vmem:[#allocation5 + $0x198] sm:$0xff]
    %v112 = vld [vmem:[#allocation5 + $0x1a0] sm:$0xff]
    %v113 = vld [vmem:[#allocation5 + $0x1a8] sm:$0xff]
    %v114 = vld [vmem:[#allocation5 + $0x1b0] sm:$0xff]
    %v115 = vld [vmem:[#allocation5 + $0x1b8] sm:$0xff]
    %v116 = vld [vmem:[#allocation5 + $0x1c0] sm:$0xff]
    %v117 = vld [vmem:[#allocation5 + $0x1c8] sm:$0xff]
    %v118 = vld [vmem:[#allocation5 + $0x1d0] sm:$0xff]
    %v119 = vld [vmem:[#allocation5 + $0x1d8] sm:$0xff]
    %v120 = vld [vmem:[#allocation5 + $0x1e0] sm:$0xff]
    %v121 = vld [vmem:[#allocation5 + $0x1e8] sm:$0xff]
    %v122 = vld [vmem:[#allocation5 + $0x1f0] sm:$0xff]
    %v123 = vld [vmem:[#allocation5 + $0x1f8] sm:$0xff]
    %v124 = vld [vmem:[#allocation5 + $0x200] sm:$0xff]
    %v125 = vld [vmem:[#allocation5 + $0x208] sm:$0xff]
    %v126 = vld [vmem:[#allocation5 + $0x210] sm:$0xff]
    %v127 = vld [vmem:[#allocation5 + $0x218] sm:$0xff]
    %v128 = vld [vmem:[#allocation5 + $0x220] sm:$0xff]
    %v129 = vld [vmem:[#allocation5 + $0x228] sm:$0xff]
    %v130 = vld [vmem:[#allocation5 + $0x230] sm:$0xff]
    %v131 = vld [vmem:[#allocation5 + $0x238] sm:$0xff]
    %v132 = vld [vmem:[#allocation5 + $0x240] sm:$0xff]
    %v133 = vld [vmem:[#allocation5 + $0x248] sm:$0xff]
    %v134 = vld [vmem:[#allocation5 + $0x250] sm:$0xff]
    %v135 = vld [vmem:[#allocation5 + $0x258] sm:$0xff]
    %v136 = vld [vmem:[#allocation5 + $0x260] sm:$0xff]
    %v137 = vld [vmem:[#allocation5 + $0x268] sm:$0xff]
    %v138 = vld [vmem:[#allocation5 + $0x270] sm:$0xff]
    %v139 = vld [vmem:[#allocation5 + $0x278] sm:$0xff]
    %v140 = vld [vmem:[#allocation5 + $0x280] sm:$0xff]
    %v141 = vld [vmem:[#allocation5 + $0x288] sm:$0xff]
    %v142 = vld [vmem:[#allocation5 + $0x290] sm:$0xff]
    %v143 = vld [vmem:[#allocation5 + $0x298] sm:$0xff]
    %v144 = vld [vmem:[#allocation5 + $0x2a0] sm:$0xff]
    %v145 = vld [vmem:[#allocation5 + $0x2a8] sm:$0xff]
    %v146 = vld [vmem:[#allocation5 + $0x2b0] sm:$0xff]
    %v147 = vld [vmem:[#allocation5 + $0x2b8] sm:$0xff]
    %v148 = vld [vmem:[#allocation5 + $0x2c0] sm:$0xff]
    %v149 = vld [vmem:[#allocation5 + $0x2c8] sm:$0xff]
    %v150 = vld [vmem:[#allocation5 + $0x2d0] sm:$0xff]
    %v151 = vld [vmem:[#allocation5 + $0x2d8] sm:$0xff]
    %v152 = vld [vmem:[#allocation5 + $0x2e0] sm:$0xff]
    %v153 = vld [vmem:[#allocation5 + $0x2e8] sm:$0xff]
    %v154 = vld [vmem:[#allocation5 + $0x2f0] sm:$0xff]
    %v155 = vld [vmem:[#allocation5 + $0x2f8] sm:$0xff]
    %v156 = vld [vmem:[#allocation5 + $0x300] sm:$0xff]
    %v157 = vld [vmem:[#allocation5 + $0x308] sm:$0xff]
    %v158 = vld [vmem:[#allocation5 + $0x310] sm:$0xff]
    %v159 = vld [vmem:[#allocation5 + $0x318] sm:$0xff]
    %v160 = vld [vmem:[#allocation5 + $0x320] sm:$0xff]
    %v161 = vld [vmem:[#allocation5 + $0x328] sm:$0xff]
    %v162 = vld [vmem:[#allocation5 + $0x330] sm:$0xff]
    %v163 = vld [vmem:[#allocation5 + $0x338] sm:$0xff]
    %v164 = vld [vmem:[#allocation5 + $0x340] sm:$0xff]
    %v165 = vld [vmem:[#allocation5 + $0x348] sm:$0xff]
    %v166 = vld [vmem:[#allocation5 + $0x350] sm:$0xff]
    %v167 = vld [vmem:[#allocation5 + $0x358] sm:$0xff]
    %v168 = vld [vmem:[#allocation5 + $0x360] sm:$0xff]
    %v169 = vld [vmem:[#allocation5 + $0x368] sm:$0xff]
    %v170 = vld [vmem:[#allocation5 + $0x370] sm:$0xff]
    %v171 = vld [vmem:[#allocation5 + $0x378] sm:$0xff]
    %v172 = vld [vmem:[#allocation5 + $0x380] sm:$0xff]
    %v173 = vld [vmem:[#allocation5 + $0x388] sm:$0xff]
    %v174 = vld [vmem:[#allocation5 + $0x390] sm:$0xff]
    %v175 = vld [vmem:[#allocation5 + $0x398] sm:$0xff]
    %v176 = vld [vmem:[#allocation5 + $0x3a0] sm:$0xff]
    %v177 = vld [vmem:[#allocation5 + $0x3a8] sm:$0xff]
    %v178 = vld [vmem:[#allocation5 + $0x3b0] sm:$0xff]
    %v179 = vld [vmem:[#allocation5 + $0x3b8] sm:$0xff]
    %v180 = vld [vmem:[#allocation5 + $0x3c0] sm:$0xff]
    %v181 = vld [vmem:[#allocation5 + $0x3c8] sm:$0xff]
    %v182 = vld [vmem:[#allocation5 + $0x3d0] sm:$0xff]
    %v183 = vld [vmem:[#allocation5 + $0x3d8] sm:$0xff]
    %v184 = vld [vmem:[#allocation5 + $0x3e0] sm:$0xff]
    %v185 = vld [vmem:[#allocation5 + $0x3e8] sm:$0xff]
    %v186 = vld [vmem:[#allocation5 + $0x3f0] sm:$0xff]
    %v187 = vld [vmem:[#allocation5 + $0x3f8] sm:$0xff]
    %v188 = vld [vmem:[#allocation5 + $0x400] sm:$0xff]
    %v189 = vld [vmem:[#allocation5 + $0x408] sm:$0xff]
    %v190 = vld [vmem:[#allocation5 + $0x410] sm:$0xff]
    %v191 = vld [vmem:[#allocation5 + $0x418] sm:$0xff]
    %v192 = vld [vmem:[#allocation5 + $0x420] sm:$0xff]
    %v193 = vld [vmem:[#allocation5 + $0x428] sm:$0xff]
    %v194 = vld [vmem:[#allocation5 + $0x430] sm:$0xff]
    %v195 = vld [vmem:[#allocation5 + $0x438] sm:$0xff]
    %v196 = vld [vmem:[#allocation5 + $0x440] sm:$0xff]
    %v197 = vld [vmem:[#allocation5 + $0x448] sm:$0xff]
    %v198 = vld [vmem:[#allocation5 + $0x450] sm:$0xff]
    %v199 = vld [vmem:[#allocation5 + $0x458] sm:$0xff]
    %v200 = vld [vmem:[#allocation5 + $0x460] sm:$0xff]
    %v201 = vld [vmem:[#allocation5 + $0x468] sm:$0xff]
    %v202 = vld [vmem:[#allocation5 + $0x470] sm:$0xff]
    %v203 = vld [vmem:[#allocation5 + $0x478] sm:$0xff]
    %v204 = vld [vmem:[#allocation5 + $0x480] sm:$0xff]
    %v205 = vld [vmem:[#allocation5 + $0x488] sm:$0xff]
    %v206 = vld [vmem:[#allocation5 + $0x490] sm:$0xff]
    %v207 = vld [vmem:[#allocation5 + $0x498] sm:$0xff]
    %v208 = vld [vmem:[#allocation5 + $0x4a0] sm:$0xff]
    %v209 = vld [vmem:[#allocation5 + $0x4a8] sm:$0xff]
    %v210 = vld [vmem:[#allocation5 + $0x4b0] sm:$0xff]
    %v211 = vld [vmem:[#allocation5 + $0x4b8] sm:$0xff]
    %v212 = vld [vmem:[#allocation5 + $0x4c0] sm:$0xff]
    %v213 = vld [vmem:[#allocation5 + $0x4c8] sm:$0xff]
    %v214 = vld [vmem:[#allocation5 + $0x4d0] sm:$0xff]
    %v215 = vld [vmem:[#allocation5 + $0x4d8] sm:$0xff]
    %v216 = vld [vmem:[#allocation5 + $0x4e0] sm:$0xff]
    %v217 = vld [vmem:[#allocation5 + $0x4e8] sm:$0xff]
    %v218 = vld [vmem:[#allocation5 + $0x4f0] sm:$0xff]
    %v219 = vld [vmem:[#allocation5 + $0x4f8] sm:$0xff]
    %v220 = vld [vmem:[#allocation5 + $0x500] sm:$0xff]
    %v221 = vld [vmem:[#allocation5 + $0x508] sm:$0xff]
    %v222 = vld [vmem:[#allocation5 + $0x510] sm:$0xff]
    %v223 = vld [vmem:[#allocation5 + $0x518] sm:$0xff]
    %v224 = vld [vmem:[#allocation5 + $0x520] sm:$0xff]
    %v225 = vld [vmem:[#allocation5 + $0x528] sm:$0xff]
    %v226 = vld [vmem:[#allocation5 + $0x530] sm:$0xff]
    %v227 = vld [vmem:[#allocation5 + $0x538] sm:$0xff]
    %v228 = vld [vmem:[#allocation5 + $0x540] sm:$0xff]
    %v229 = vld [vmem:[#allocation5 + $0x548] sm:$0xff]
    %v230 = vld [vmem:[#allocation5 + $0x550] sm:$0xff]
    %v231 = vld [vmem:[#allocation5 + $0x558] sm:$0xff]
    %v232 = vld [vmem:[#allocation5 + $0x560] sm:$0xff]
    %v233 = vld [vmem:[#allocation5 + $0x568] sm:$0xff]
    %v234 = vld [vmem:[#allocation5 + $0x570] sm:$0xff]
    %v235 = vld [vmem:[#allocation5 + $0x578] sm:$0xff]
    %v236 = vld [vmem:[#allocation5 + $0x580] sm:$0xff]
    %v237 = vld [vmem:[#allocation5 + $0x588] sm:$0xff]
    %v238 = vld [vmem:[#allocation5 + $0x590] sm:$0xff]
    %v239 = vld [vmem:[#allocation5 + $0x598] sm:$0xff]
    %v240 = vld [vmem:[#allocation5 + $0x5a0] sm:$0xff]
    %v241 = vld [vmem:[#allocation5 + $0x5a8] sm:$0xff]
    %v242 = vld [vmem:[#allocation5 + $0x5b0] sm:$0xff]
    %v243 = vld [vmem:[#allocation5 + $0x5b8] sm:$0xff]
    %v244 = vld [vmem:[#allocation5 + $0x5c0] sm:$0xff]
    %v245 = vld [vmem:[#allocation5 + $0x5c8] sm:$0xff]
    %v246 = vld [vmem:[#allocation5 + $0x5d0] sm:$0xff]
    %v247 = vld [vmem:[#allocation5 + $0x5d8] sm:$0xff]
    %v248 = vld [vmem:[#allocation5 + $0x5e0] sm:$0xff]
    %v249 = vld [vmem:[#allocation5 + $0x5e8] sm:$0xff]
    %v250 = vld [vmem:[#allocation5 + $0x5f0] sm:$0xff]
    %v251 = vld [vmem:[#allocation5 + $0x5f8] sm:$0xff]
    %v252 = vld [vmem:[#allocation5 + $0x600] sm:$0xff]
    %v253 = vld [vmem:[#allocation5 + $0x608] sm:$0xff]
    %v254 = vld [vmem:[#allocation5 + $0x610] sm:$0xff]
    %v255 = vld [vmem:[#allocation5 + $0x618] sm:$0xff]
    %v256 = vld [vmem:[#allocation5 + $0x620] sm:$0xff]
    %v257 = vld [vmem:[#allocation5 + $0x628] sm:$0xff]
    %v258 = vld [vmem:[#allocation5 + $0x630] sm:$0xff]
    %v259 = vld [vmem:[#allocation5 + $0x638] sm:$0xff]
    %v260 = vld [vmem:[#allocation5 + $0x640] sm:$0xff]
    %v261 = vld [vmem:[#allocation5 + $0x648] sm:$0xff]
    %v262 = vld [vmem:[#allocation5 + $0x650] sm:$0xff]
    %v263 = vld [vmem:[#allocation5 + $0x658] sm:$0xff]
    %v264 = vld [vmem:[#allocation5 + $0x660] sm:$0xff]
    %v265 = vld [vmem:[#allocation5 + $0x668] sm:$0xff]
    %v266 = vld [vmem:[#allocation5 + $0x670] sm:$0xff]
    %v267 = vld [vmem:[#allocation5 + $0x678] sm:$0xff]
    %v268 = vld [vmem:[#allocation5 + $0x680] sm:$0xff]
    %v269 = vld [vmem:[#allocation5 + $0x688] sm:$0xff]
    %v270 = vld [vmem:[#allocation5 + $0x690] sm:$0xff]
    %v271 = vld [vmem:[#allocation5 + $0x698] sm:$0xff]
    %v272 = vld [vmem:[#allocation5 + $0x6a0] sm:$0xff]
    %v273 = vld [vmem:[#allocation5 + $0x6a8] sm:$0xff]
    %v274 = vld [vmem:[#allocation5 + $0x6b0] sm:$0xff]
    %v275 = vld [vmem:[#allocation5 + $0x6b8] sm:$0xff]
    %v276 = vld [vmem:[#allocation5 + $0x6c0] sm:$0xff]
    %v277 = vld [vmem:[#allocation5 + $0x6c8] sm:$0xff]
    %v278 = vld [vmem:[#allocation5 + $0x6d0] sm:$0xff]
    %v279 = vld [vmem:[#allocation5 + $0x6d8] sm:$0xff]
    %v280 = vld [vmem:[#allocation5 + $0x6e0] sm:$0xff]
    %v281 = vld [vmem:[#allocation5 + $0x6e8] sm:$0xff]
    %v282 = vld [vmem:[#allocation5 + $0x6f0] sm:$0xff]
    %v283 = vld [vmem:[#allocation5 + $0x6f8] sm:$0xff]
    %v284 = vld [vmem:[#allocation5 + $0x700] sm:$0xff]
    %v285 = vld [vmem:[#allocation5 + $0x708] sm:$0xff]
    %v286 = vld [vmem:[#allocation5 + $0x710] sm:$0xff]
    %v287 = vld [vmem:[#allocation5 + $0x718] sm:$0xff]
    %v288 = vld [vmem:[#allocation5 + $0x720] sm:$0xff]
    %v289 = vld [vmem:[#allocation5 + $0x728] sm:$0xff]
    %v290 = vld [vmem:[#allocation5 + $0x730] sm:$0xff]
    %v291 = vld [vmem:[#allocation5 + $0x738] sm:$0xff]
    %v292 = vld [vmem:[#allocation5 + $0x740] sm:$0xff]
    %v293 = vld [vmem:[#allocation5 + $0x748] sm:$0xff]
    %v294 = vld [vmem:[#allocation5 + $0x750] sm:$0xff]
    %v295 = vld [vmem:[#allocation5 + $0x758] sm:$0xff]
    %v296 = vld [vmem:[#allocation5 + $0x760] sm:$0xff]
    %v297 = vld [vmem:[#allocation5 + $0x768] sm:$0xff]
    %v298 = vld [vmem:[#allocation5 + $0x770] sm:$0xff]
    %v299 = vld [vmem:[#allocation5 + $0x778] sm:$0xff]
    %v300 = vld [vmem:[#allocation5 + $0x780] sm:$0xff]
    %v301 = vld [vmem:[#allocation5 + $0x788] sm:$0xff]
    %v302 = vld [vmem:[#allocation5 + $0x790] sm:$0xff]
    %v303 = vld [vmem:[#allocation5 + $0x798] sm:$0xff]
    %v304 = vld [vmem:[#allocation5 + $0x7a0] sm:$0xff]
    %v305 = vld [vmem:[#allocation5 + $0x7a8] sm:$0xff]
    %v306 = vld [vmem:[#allocation5 + $0x7b0] sm:$0xff]
    %v307 = vld [vmem:[#allocation5 + $0x7b8] sm:$0xff]
    %v308 = vld [vmem:[#allocation5 + $0x7c0] sm:$0xff]
    %v309 = vld [vmem:[#allocation5 + $0x7c8] sm:$0xff]
    %v310 = vld [vmem:[#allocation5 + $0x7d0] sm:$0xff]
    %v311 = vld [vmem:[#allocation5 + $0x7d8] sm:$0xff]
    %v312 = vld [vmem:[#allocation5 + $0x7e0] sm:$0xff]
    %v313 = vld [vmem:[#allocation5 + $0x7e8] sm:$0xff]
    %v314 = vld [vmem:[#allocation5 + $0x7f0] sm:$0xff]
    %v315 = vld [vmem:[#allocation5 + $0x7f8] sm:$0xff]
    %v316 = vld [vmem:[#allocation5 + $0x800] sm:$0xff]
    %v317 = vld [vmem:[#allocation5 + $0x808] sm:$0xff]
    %v318 = vld [vmem:[#allocation5 + $0x810] sm:$0xff]
    %v319 = vld [vmem:[#allocation5 + $0x818] sm:$0xff]
    %v320 = vld [vmem:[#allocation5 + $0x820] sm:$0xff]
    %v321 = vld [vmem:[#allocation5 + $0x828] sm:$0xff]
    %v322 = vld [vmem:[#allocation5 + $0x830] sm:$0xff]
    %v323 = vld [vmem:[#allocation5 + $0x838] sm:$0xff]
    %v324 = vld [vmem:[#allocation5 + $0x840] sm:$0xff]
    %v325 = vld [vmem:[#allocation5 + $0x848] sm:$0xff]
    %v326 = vld [vmem:[#allocation5 + $0x850] sm:$0xff]
    %v327 = vld [vmem:[#allocation5 + $0x858] sm:$0xff]
    %v328 = vld [vmem:[#allocation5 + $0x860] sm:$0xff]
    %v329 = vld [vmem:[#allocation5 + $0x868] sm:$0xff]
    %v330 = vld [vmem:[#allocation5 + $0x870] sm:$0xff]
    %v331 = vld [vmem:[#allocation5 + $0x878] sm:$0xff]
    %v332 = vld [vmem:[#allocation5 + $0x880] sm:$0xff]
    %v333 = vld [vmem:[#allocation5 + $0x888] sm:$0xff]
    %v334 = vld [vmem:[#allocation5 + $0x890] sm:$0xff]
    %v335 = vld [vmem:[#allocation5 + $0x898] sm:$0xff]
    %v336 = vld [vmem:[#allocation5 + $0x8a0] sm:$0xff]
    %v337 = vld [vmem:[#allocation5 + $0x8a8] sm:$0xff]
    %v338 = vld [vmem:[#allocation5 + $0x8b0] sm:$0xff]
    %v339 = vld [vmem:[#allocation5 + $0x8b8] sm:$0xff]
    %v340 = vld [vmem:[#allocation5 + $0x8c0] sm:$0xff]
    %v341 = vld [vmem:[#allocation5 + $0x8c8] sm:$0xff]
    %v342 = vld [vmem:[#allocation5 + $0x8d0] sm:$0xff]
    %v343 = vld [vmem:[#allocation5 + $0x8d8] sm:$0xff]
    %v344 = vld [vmem:[#allocation5 + $0x8e0] sm:$0xff]
    %v345 = vld [vmem:[#allocation5 + $0x8e8] sm:$0xff]
    %v346 = vld [vmem:[#allocation5 + $0x8f0] sm:$0xff]
    %v347 = vld [vmem:[#allocation5 + $0x8f8] sm:$0xff]
    %v348 = vld [vmem:[#allocation5 + $0x900] sm:$0xff]
    %v349 = vld [vmem:[#allocation5 + $0x908] sm:$0xff]
    %v350 = vld [vmem:[#allocation5 + $0x910] sm:$0xff]
    %v351 = vld [vmem:[#allocation5 + $0x918] sm:$0xff]
    %v352 = vld [vmem:[#allocation5 + $0x920] sm:$0xff]
    %v353 = vld [vmem:[#allocation5 + $0x928] sm:$0xff]
    %v354 = vld [vmem:[#allocation5 + $0x930] sm:$0xff]
    %v355 = vld [vmem:[#allocation5 + $0x938] sm:$0xff]
    %v356 = vld [vmem:[#allocation5 + $0x940] sm:$0xff]
    %v357 = vld [vmem:[#allocation5 + $0x948] sm:$0xff]
    %v358 = vld [vmem:[#allocation5 + $0x950] sm:$0xff]
    %v359 = vld [vmem:[#allocation5 + $0x958] sm:$0xff]
    %v360 = vld [vmem:[#allocation5 + $0x960] sm:$0xff]
    %v361 = vld [vmem:[#allocation5 + $0x968] sm:$0xff]
    %v362 = vld [vmem:[#allocation5 + $0x970] sm:$0xff]
    %v363 = vld [vmem:[#allocation5 + $0x978] sm:$0xff]
    %v364 = vld [vmem:[#allocation5 + $0x980] sm:$0xff]
    %v365 = vld [vmem:[#allocation5 + $0x988] sm:$0xff]
    %v366 = vld [vmem:[#allocation5 + $0x990] sm:$0xff]
    %v367 = vld [vmem:[#allocation5 + $0x998] sm:$0xff]
    %v368 = vld [vmem:[#allocation5 + $0x9a0] sm:$0xff]
    %v369 = vld [vmem:[#allocation5 + $0x9a8] sm:$0xff]
    %v370 = vld [vmem:[#allocation5 + $0x9b0] sm:$0xff]
    %v371 = vld [vmem:[#allocation5 + $0x9b8] sm:$0xff]
    %v372 = vld [vmem:[#allocation5 + $0x9c0] sm:$0xff]
    %v373 = vld [vmem:[#allocation5 + $0x9c8] sm:$0xff]
    %v374 = vld [vmem:[#allocation5 + $0x9d0] sm:$0xff]
    %v375 = vld [vmem:[#allocation5 + $0x9d8] sm:$0xff]
    %v376 = vld [vmem:[#allocation5 + $0x9e0] sm:$0xff]
    %v377 = vld [vmem:[#allocation5 + $0x9e8] sm:$0xff]
    %v378 = vld [vmem:[#allocation5 + $0x9f0] sm:$0xff]
    %v379 = vld [vmem:[#allocation5 + $0x9f8] sm:$0xff]
    %v380 = vld [vmem:[#allocation5 + $0xa00] sm:$0xff]
    %v381 = vld [vmem:[#allocation5 + $0xa08] sm:$0xff]
    %v382 = vld [vmem:[#allocation5 + $0xa10] sm:$0xff]
    %v383 = vld [vmem:[#allocation5 + $0xa18] sm:$0xff]
    %v384 = vld [vmem:[#allocation5 + $0xa20] sm:$0xff]
    %v385 = vld [vmem:[#allocation5 + $0xa28] sm:$0xff]
    %v386 = vld [vmem:[#allocation5 + $0xa30] sm:$0xff]
    %v387 = vld [vmem:[#allocation5 + $0xa38] sm:$0xff]
    %v388 = vld [vmem:[#allocation5 + $0xa40] sm:$0xff]
    %v389 = vld [vmem:[#allocation5 + $0xa48] sm:$0xff]
    %v390 = vld [vmem:[#allocation5 + $0xa50] sm:$0xff]
    %v391 = vld [vmem:[#allocation5 + $0xa58] sm:$0xff]
    %v392 = vld [vmem:[#allocation5 + $0xa60] sm:$0xff]
    %v393 = vld [vmem:[#allocation5 + $0xa68] sm:$0xff]
    %v394 = vld [vmem:[#allocation5 + $0xa70] sm:$0xff]
    %v395 = vld [vmem:[#allocation5 + $0xa78] sm:$0xff]
    %v396 = vld [vmem:[#allocation5 + $0xa80] sm:$0xff]
    %v397 = vld [vmem:[#allocation5 + $0xa88] sm:$0xff]
    %v398 = vld [vmem:[#allocation5 + $0xa90] sm:$0xff]
    %v399 = vld [vmem:[#allocation5 + $0xa98] sm:$0xff]
    %v400 = vld [vmem:[#allocation5 + $0xaa0] sm:$0xff]
    %v401 = vld [vmem:[#allocation5 + $0xaa8] sm:$0xff]
    %v402 = vld [vmem:[#allocation5 + $0xab0] sm:$0xff]
    %v403 = vld [vmem:[#allocation5 + $0xab8] sm:$0xff]
    %v404 = vld [vmem:[#allocation5 + $0xac0] sm:$0xff]
    %v405 = vld [vmem:[#allocation5 + $0xac8] sm:$0xff]
    %v406 = vld [vmem:[#allocation5 + $0xad0] sm:$0xff]
    %v407 = vld [vmem:[#allocation5 + $0xad8] sm:$0xff]
    %v408 = vld [vmem:[#allocation5 + $0xae0] sm:$0xff]
    %v409 = vld [vmem:[#allocation5 + $0xae8] sm:$0xff]
    %v410 = vld [vmem:[#allocation5 + $0xaf0] sm:$0xff]
    %v411 = vld [vmem:[#allocation5 + $0xaf8] sm:$0xff]
    %v412 = vld [vmem:[#allocation5 + $0xb00] sm:$0xff]
    %v413 = vld [vmem:[#allocation5 + $0xb08] sm:$0xff]
    %v414 = vld [vmem:[#allocation5 + $0xb10] sm:$0xff]
    %v415 = vld [vmem:[#allocation5 + $0xb18] sm:$0xff]
    %v416 = vld [vmem:[#allocation5 + $0xb20] sm:$0xff]
    %v417 = vld [vmem:[#allocation5 + $0xb28] sm:$0xff]
    %v418 = vld [vmem:[#allocation5 + $0xb30] sm:$0xff]
    %v419 = vld [vmem:[#allocation5 + $0xb38] sm:$0xff]
    %v420 = vld [vmem:[#allocation5 + $0xb40] sm:$0xff]
    %v421 = vld [vmem:[#allocation5 + $0xb48] sm:$0xff]
    %v422 = vld [vmem:[#allocation5 + $0xb50] sm:$0xff]
    %v423 = vld [vmem:[#allocation5 + $0xb58] sm:$0xff]
    %v424 = vld [vmem:[#allocation5 + $0xb60] sm:$0xff]
    %v425 = vld [vmem:[#allocation5 + $0xb68] sm:$0xff]
    %v426 = vld [vmem:[#allocation5 + $0xb70] sm:$0xff]
    %v427 = vld [vmem:[#allocation5 + $0xb78] sm:$0xff]
    %v428 = vld [vmem:[#allocation5 + $0xb80] sm:$0xff]
    %v429 = vld [vmem:[#allocation5 + $0xb88] sm:$0xff]
    %v430 = vld [vmem:[#allocation5 + $0xb90] sm:$0xff]
    %v431 = vld [vmem:[#allocation5 + $0xb98] sm:$0xff]
    %v432 = vld [vmem:[#allocation5 + $0xba0] sm:$0xff]
    %v433 = vld [vmem:[#allocation5 + $0xba8] sm:$0xff]
    %v434 = vld [vmem:[#allocation5 + $0xbb0] sm:$0xff]
    %v435 = vld [vmem:[#allocation5 + $0xbb8] sm:$0xff]
    %v436 = vld [vmem:[#allocation5 + $0xbc0] sm:$0xff]
    %v437 = vld [vmem:[#allocation5 + $0xbc8] sm:$0xff]
    %v438 = vld [vmem:[#allocation5 + $0xbd0] sm:$0xff]
    %v439 = vld [vmem:[#allocation5 + $0xbd8] sm:$0xff]
    %v440 = vld [vmem:[#allocation5 + $0xbe0] sm:$0xff]
    %v441 = vld [vmem:[#allocation5 + $0xbe8] sm:$0xff]
    %v442 = vld [vmem:[#allocation5 + $0xbf0] sm:$0xff]
    %v443 = vld [vmem:[#allocation5 + $0xbf8] sm:$0xff]
    %v444 = vld [vmem:[#allocation5 + $0xc00] sm:$0xff]
    %v445 = vld [vmem:[#allocation5 + $0xc08] sm:$0xff]
    %v446 = vld [vmem:[#allocation5 + $0xc10] sm:$0xff]
    %v447 = vld [vmem:[#allocation5 + $0xc18] sm:$0xff]
    %v448 = vld [vmem:[#allocation5 + $0xc20] sm:$0xff]
    %v449 = vld [vmem:[#allocation5 + $0xc28] sm:$0xff]
    %v450 = vld [vmem:[#allocation5 + $0xc30] sm:$0xff]
    %v451 = vld [vmem:[#allocation5 + $0xc38] sm:$0xff]
    %v452 = vld [vmem:[#allocation5 + $0xc40] sm:$0xff]
    %v453 = vld [vmem:[#allocation5 + $0xc48] sm:$0xff]
    %v454 = vld [vmem:[#allocation5 + $0xc50] sm:$0xff]
    %v455 = vld [vmem:[#allocation5 + $0xc58] sm:$0xff]
    %v456 = vld [vmem:[#allocation5 + $0xc60] sm:$0xff]
    %v457 = vld [vmem:[#allocation5 + $0xc68] sm:$0xff]
    %v458 = vld [vmem:[#allocation5 + $0xc70] sm:$0xff]
    %v459 = vld [vmem:[#allocation5 + $0xc78] sm:$0xff]
    %v460 = vld [vmem:[#allocation5 + $0xc80] sm:$0xff]
    %v461 = vld [vmem:[#allocation5 + $0xc88] sm:$0xff]
    %v462 = vld [vmem:[#allocation5 + $0xc90] sm:$0xff]
    %v463 = vld [vmem:[#allocation5 + $0xc98] sm:$0xff]
    %v464 = vld [vmem:[#allocation5 + $0xca0] sm:$0xff]
    %v465 = vld [vmem:[#allocation5 + $0xca8] sm:$0xff]
    %v466 = vld [vmem:[#allocation5 + $0xcb0] sm:$0xff]
    %v467 = vld [vmem:[#allocation5 + $0xcb8] sm:$0xff]
    %v468 = vld [vmem:[#allocation5 + $0xcc0] sm:$0xff]
    %v469 = vld [vmem:[#allocation5 + $0xcc8] sm:$0xff]
    %v470 = vld [vmem:[#allocation5 + $0xcd0] sm:$0xff]
    %v471 = vld [vmem:[#allocation5 + $0xcd8] sm:$0xff]
    %v472 = vld [vmem:[#allocation5 + $0xce0] sm:$0xff]
    %v473 = vld [vmem:[#allocation5 + $0xce8] sm:$0xff]
    %v474 = vld [vmem:[#allocation5 + $0xcf0] sm:$0xff]
    %v475 = vld [vmem:[#allocation5 + $0xcf8] sm:$0xff]
    %v476 = vld [vmem:[#allocation5 + $0xd00] sm:$0xff]
    %v477 = vld [vmem:[#allocation5 + $0xd08] sm:$0xff]
    %v478 = vld [vmem:[#allocation5 + $0xd10] sm:$0xff]
    %v479 = vld [vmem:[#allocation5 + $0xd18] sm:$0xff]
    %v480 = vld [vmem:[#allocation5 + $0xd20] sm:$0xff]
    %v481 = vld [vmem:[#allocation5 + $0xd28] sm:$0xff]
    %v482 = vld [vmem:[#allocation5 + $0xd30] sm:$0xff]
    %v483 = vld [vmem:[#allocation5 + $0xd38] sm:$0xff]
    %v484 = vld [vmem:[#allocation5 + $0xd40] sm:$0xff]
    %v485 = vld [vmem:[#allocation5 + $0xd48] sm:$0xff]
    %v486 = vld [vmem:[#allocation5 + $0xd50] sm:$0xff]
    %v487 = vld [vmem:[#allocation5 + $0xd58] sm:$0xff]
    %v488 = vld [vmem:[#allocation5 + $0xd60] sm:$0xff]
    %v489 = vld [vmem:[#allocation5 + $0xd68] sm:$0xff]
    %v490 = vld [vmem:[#allocation5 + $0xd70] sm:$0xff]
    %v491 = vld [vmem:[#allocation5 + $0xd78] sm:$0xff]
    %v492 = vld [vmem:[#allocation5 + $0xd80] sm:$0xff]
    %v493 = vld [vmem:[#allocation5 + $0xd88] sm:$0xff]
    %v494 = vld [vmem:[#allocation5 + $0xd90] sm:$0xff]
    %v495 = vld [vmem:[#allocation5 + $0xd98] sm:$0xff]
    %v496 = vld [vmem:[#allocation5 + $0xda0] sm:$0xff]
    %v497 = vld [vmem:[#allocation5 + $0xda8] sm:$0xff]
    %v498 = vld [vmem:[#allocation5 + $0xdb0] sm:$0xff]
    %v499 = vld [vmem:[#allocation5 + $0xdb8] sm:$0xff]
    %v500 = vld [vmem:[#allocation5 + $0xdc0] sm:$0xff]
    %v501 = vld [vmem:[#allocation5 + $0xdc8] sm:$0xff]
    %v502 = vld [vmem:[#allocation5 + $0xdd0] sm:$0xff]
    %v503 = vld [vmem:[#allocation5 + $0xdd8] sm:$0xff]
    %v504 = vld [vmem:[#allocation5 + $0xde0] sm:$0xff]
    %v505 = vld [vmem:[#allocation5 + $0xde8] sm:$0xff]
    %v506 = vld [vmem:[#allocation5 + $0xdf0] sm:$0xff]
    %v507 = vld [vmem:[#allocation5 + $0xdf8] sm:$0xff]
    %v508 = vld [vmem:[#allocation5 + $0xe00] sm:$0xff]
    %v509 = vld [vmem:[#allocation5 + $0xe08] sm:$0xff]
    %v510 = vld [vmem:[#allocation5 + $0xe10] sm:$0xff]
    %v511 = vld [vmem:[#allocation5 + $0xe18] sm:$0xff]
    %v512 = vld [vmem:[#allocation5 + $0xe20] sm:$0xff]
    %v513 = vld [vmem:[#allocation5 + $0xe28] sm:$0xff]
    %v514 = vld [vmem:[#allocation5 + $0xe30] sm:$0xff]
    %v515 = vld [vmem:[#allocation5 + $0xe38] sm:$0xff]
    %v516 = vld [vmem:[#allocation5 + $0xe40] sm:$0xff]
    %v517 = vld [vmem:[#allocation5 + $0xe48] sm:$0xff]
    %v518 = vld [vmem:[#allocation5 + $0xe50] sm:$0xff]
    %v519 = vld [vmem:[#allocation5 + $0xe58] sm:$0xff]
    %v520 = vld [vmem:[#allocation5 + $0xe60] sm:$0xff]
    %v521 = vld [vmem:[#allocation5 + $0xe68] sm:$0xff]
    %v522 = vld [vmem:[#allocation5 + $0xe70] sm:$0xff]
    %v523 = vld [vmem:[#allocation5 + $0xe78] sm:$0xff]
    %v524 = vld [vmem:[#allocation5 + $0xe80] sm:$0xff]
    %v525 = vld [vmem:[#allocation5 + $0xe88] sm:$0xff]
    %v526 = vld [vmem:[#allocation5 + $0xe90] sm:$0xff]
    %v527 = vld [vmem:[#allocation5 + $0xe98] sm:$0xff]
    %v528 = vld [vmem:[#allocation5 + $0xea0] sm:$0xff]
    %v529 = vld [vmem:[#allocation5 + $0xea8] sm:$0xff]
    %v530 = vld [vmem:[#allocation5 + $0xeb0] sm:$0xff]
    %v531 = vld [vmem:[#allocation5 + $0xeb8] sm:$0xff]
    %v532 = vld [vmem:[#allocation5 + $0xec0] sm:$0xff]
    %v533 = vld [vmem:[#allocation5 + $0xec8] sm:$0xff]
    %v534 = vld [vmem:[#allocation5 + $0xed0] sm:$0xff]
    %v535 = vld [vmem:[#allocation5 + $0xed8] sm:$0xff]
    %v536 = vld [vmem:[#allocation5 + $0xee0] sm:$0xff]
    %v537 = vld [vmem:[#allocation5 + $0xee8] sm:$0xff]
    %v538 = vld [vmem:[#allocation5 + $0xef0] sm:$0xff]
    %v539 = vld [vmem:[#allocation5 + $0xef8] sm:$0xff]
    %v540 = vld [vmem:[#allocation5 + $0xf00] sm:$0xff]
    %v541 = vld [vmem:[#allocation5 + $0xf08] sm:$0xff]
    %v542 = vld [vmem:[#allocation5 + $0xf10] sm:$0xff]
    %v543 = vld [vmem:[#allocation5 + $0xf18] sm:$0xff]
    %v544 = vld [vmem:[#allocation5 + $0xf20] sm:$0xff]
    %v545 = vld [vmem:[#allocation5 + $0xf28] sm:$0xff]
    %v546 = vld [vmem:[#allocation5 + $0xf30] sm:$0xff]
    %v547 = vld [vmem:[#allocation5 + $0xf38] sm:$0xff]
    %v548 = vld [vmem:[#allocation5 + $0xf40] sm:$0xff]
    %v549 = vld [vmem:[#allocation5 + $0xf48] sm:$0xff]
    %v550 = vld [vmem:[#allocation5 + $0xf50] sm:$0xff]
    %v551 = vld [vmem:[#allocation5 + $0xf58] sm:$0xff]
    %v552 = vld [vmem:[#allocation5 + $0xf60] sm:$0xff]
    %v553 = vld [vmem:[#allocation5 + $0xf68] sm:$0xff]
    %v554 = vld [vmem:[#allocation5 + $0xf70] sm:$0xff]
    %v555 = vld [vmem:[#allocation5 + $0xf78] sm:$0xff]
    %v556 = vld [vmem:[#allocation5 + $0xf80] sm:$0xff]
    %v557 = vld [vmem:[#allocation5 + $0xf88] sm:$0xff]
    %v558 = vld [vmem:[#allocation5 + $0xf90] sm:$0xff]
    %v559 = vld [vmem:[#allocation5 + $0xf98] sm:$0xff]
    %v560 = vld [vmem:[#allocation5 + $0xfa0] sm:$0xff]
    %v561 = vld [vmem:[#allocation5 + $0xfa8] sm:$0xff]
    %v562 = vld [vmem:[#allocation5 + $0xfb0] sm:$0xff]
    %v563 = vld [vmem:[#allocation5 + $0xfb8] sm:$0xff]
    %v564 = vld [vmem:[#allocation5 + $0xfc0] sm:$0xff]
    %v565 = vld [vmem:[#allocation5 + $0xfc8] sm:$0xff]
    %v566 = vld [vmem:[#allocation5 + $0xfd0] sm:$0xff]
    %v567 = vld [vmem:[#allocation5 + $0xfd8] sm:$0xff]
    %v568 = vld [vmem:[#allocation5 + $0xfe0] sm:$0xff]
    %v569 = vld [vmem:[#allocation5 + $0xfe8] sm:$0xff]
    %v570 = vld [vmem:[#allocation5 + $0xff0] sm:$0xff]
    %v571 = vld [vmem:[#allocation5 + $0xff8] sm:$0xff]
    %v572 = vpack.c.bf16 %v76, %v60
    %v573 = vpack.c.bf16 %v77, %v61
    %v574 = vpack.c.bf16 %v78, %v62
    %v575 = vpack.c.bf16 %v79, %v63
    %v576 = vpack.c.bf16 %v80, %v64
    %v577 = vpack.c.bf16 %v81, %v65
    %v578 = vpack.c.bf16 %v82, %v66
    %v579 = vpack.c.bf16 %v83, %v67
    %v580 = vpack.c.bf16 %v84, %v68
    %v581 = vpack.c.bf16 %v85, %v69
    %v582 = vpack.c.bf16 %v86, %v70
    %v583 = vpack.c.bf16 %v87, %v71
    %v584 = vpack.c.bf16 %v88, %v72
    %v585 = vpack.c.bf16 %v89, %v73
    %v586 = vpack.c.bf16 %v90, %v74
    %v587 = vpack.c.bf16 %v91, %v75
    %v588 = vpack.c.bf16 %v108, %v92
    %v589 = vpack.c.bf16 %v109, %v93
    %v590 = vpack.c.bf16 %v110, %v94
    %v591 = vpack.c.bf16 %v111, %v95
    %v592 = vpack.c.bf16 %v112, %v96
    %v593 = vpack.c.bf16 %v113, %v97
    %v594 = vpack.c.bf16 %v114, %v98
    %v595 = vpack.c.bf16 %v115, %v99
    %v596 = vpack.c.bf16 %v116, %v100
    %v597 = vpack.c.bf16 %v117, %v101
    %v598 = vpack.c.bf16 %v118, %v102
    %v599 = vpack.c.bf16 %v119, %v103
    %v600 = vpack.c.bf16 %v120, %v104
    %v601 = vpack.c.bf16 %v121, %v105
    %v602 = vpack.c.bf16 %v122, %v106
    %v603 = vpack.c.bf16 %v123, %v107
    %v604 = vpack.c.bf16 %v140, %v124
    %v605 = vpack.c.bf16 %v141, %v125
    %v606 = vpack.c.bf16 %v142, %v126
    %v607 = vpack.c.bf16 %v143, %v127
    %v608 = vpack.c.bf16 %v144, %v128
    %v609 = vpack.c.bf16 %v145, %v129
    %v610 = vpack.c.bf16 %v146, %v130
    %v611 = vpack.c.bf16 %v147, %v131
    %v612 = vpack.c.bf16 %v148, %v132
    %v613 = vpack.c.bf16 %v149, %v133
    %v614 = vpack.c.bf16 %v150, %v134
    %v615 = vpack.c.bf16 %v151, %v135
    %v616 = vpack.c.bf16 %v152, %v136
    %v617 = vpack.c.bf16 %v153, %v137
    %v618 = vpack.c.bf16 %v154, %v138
    %v619 = vpack.c.bf16 %v155, %v139
    %v620 = vpack.c.bf16 %v172, %v156
    %v621 = vpack.c.bf16 %v173, %v157
    %v622 = vpack.c.bf16 %v174, %v158
    %v623 = vpack.c.bf16 %v175, %v159
    %v624 = vpack.c.bf16 %v176, %v160
    %v625 = vpack.c.bf16 %v177, %v161
    %v626 = vpack.c.bf16 %v178, %v162
    %v627 = vpack.c.bf16 %v179, %v163
    %v628 = vpack.c.bf16 %v180, %v164
    %v629 = vpack.c.bf16 %v181, %v165
    %v630 = vpack.c.bf16 %v182, %v166
    %v631 = vpack.c.bf16 %v183, %v167
    %v632 = vpack.c.bf16 %v184, %v168
    %v633 = vpack.c.bf16 %v185, %v169
    %v634 = vpack.c.bf16 %v186, %v170
    %v635 = vpack.c.bf16 %v187, %v171
    %v636 = vpack.c.bf16 %v204, %v188
    %v637 = vpack.c.bf16 %v205, %v189
    %v638 = vpack.c.bf16 %v206, %v190
    %v639 = vpack.c.bf16 %v207, %v191
    %v640 = vpack.c.bf16 %v208, %v192
    %v641 = vpack.c.bf16 %v209, %v193
    %v642 = vpack.c.bf16 %v210, %v194
    %v643 = vpack.c.bf16 %v211, %v195
    %v644 = vpack.c.bf16 %v212, %v196
    %v645 = vpack.c.bf16 %v213, %v197
    %v646 = vpack.c.bf16 %v214, %v198
    %v647 = vpack.c.bf16 %v215, %v199
    %v648 = vpack.c.bf16 %v216, %v200
    %v649 = vpack.c.bf16 %v217, %v201
    %v650 = vpack.c.bf16 %v218, %v202
    %v651 = vpack.c.bf16 %v219, %v203
    %v652 = vpack.c.bf16 %v236, %v220
    %v653 = vpack.c.bf16 %v237, %v221
    %v654 = vpack.c.bf16 %v238, %v222
    %v655 = vpack.c.bf16 %v239, %v223
    %v656 = vpack.c.bf16 %v240, %v224
    %v657 = vpack.c.bf16 %v241, %v225
    %v658 = vpack.c.bf16 %v242, %v226
    %v659 = vpack.c.bf16 %v243, %v227
    %v660 = vpack.c.bf16 %v244, %v228
    %v661 = vpack.c.bf16 %v245, %v229
    %v662 = vpack.c.bf16 %v246, %v230
    %v663 = vpack.c.bf16 %v247, %v231
    %v664 = vpack.c.bf16 %v248, %v232
    %v665 = vpack.c.bf16 %v249, %v233
    %v666 = vpack.c.bf16 %v250, %v234
    %v667 = vpack.c.bf16 %v251, %v235
    %v668 = vpack.c.bf16 %v268, %v252
    %v669 = vpack.c.bf16 %v269, %v253
    %v670 = vpack.c.bf16 %v270, %v254
    %v671 = vpack.c.bf16 %v271, %v255
    %v672 = vpack.c.bf16 %v272, %v256
    %v673 = vpack.c.bf16 %v273, %v257
    %v674 = vpack.c.bf16 %v274, %v258
    %v675 = vpack.c.bf16 %v275, %v259
    %v676 = vpack.c.bf16 %v276, %v260
    %v677 = vpack.c.bf16 %v277, %v261
    %v678 = vpack.c.bf16 %v278, %v262
    %v679 = vpack.c.bf16 %v279, %v263
    %v680 = vpack.c.bf16 %v280, %v264
    %v681 = vpack.c.bf16 %v281, %v265
    %v682 = vpack.c.bf16 %v282, %v266
    %v683 = vpack.c.bf16 %v283, %v267
    %v684 = vpack.c.bf16 %v300, %v284
    %v685 = vpack.c.bf16 %v301, %v285
    %v686 = vpack.c.bf16 %v302, %v286
    %v687 = vpack.c.bf16 %v303, %v287
    %v688 = vpack.c.bf16 %v304, %v288
    %v689 = vpack.c.bf16 %v305, %v289
    %v690 = vpack.c.bf16 %v306, %v290
    %v691 = vpack.c.bf16 %v307, %v291
    %v692 = vpack.c.bf16 %v308, %v292
    %v693 = vpack.c.bf16 %v309, %v293
    %v694 = vpack.c.bf16 %v310, %v294
    %v695 = vpack.c.bf16 %v311, %v295
    %v696 = vpack.c.bf16 %v312, %v296
    %v697 = vpack.c.bf16 %v313, %v297
    %v698 = vpack.c.bf16 %v314, %v298
    %v699 = vpack.c.bf16 %v315, %v299
    %v700 = vpack.c.bf16 %v332, %v316
    %v701 = vpack.c.bf16 %v333, %v317
    %v702 = vpack.c.bf16 %v334, %v318
    %v703 = vpack.c.bf16 %v335, %v319
    %v704 = vpack.c.bf16 %v336, %v320
    %v705 = vpack.c.bf16 %v337, %v321
    %v706 = vpack.c.bf16 %v338, %v322
    %v707 = vpack.c.bf16 %v339, %v323
    %v708 = vpack.c.bf16 %v340, %v324
    %v709 = vpack.c.bf16 %v341, %v325
    %v710 = vpack.c.bf16 %v342, %v326
    %v711 = vpack.c.bf16 %v343, %v327
    %v712 = vpack.c.bf16 %v344, %v328
    %v713 = vpack.c.bf16 %v345, %v329
    %v714 = vpack.c.bf16 %v346, %v330
    %v715 = vpack.c.bf16 %v347, %v331
    %v716 = vpack.c.bf16 %v364, %v348
    %v717 = vpack.c.bf16 %v365, %v349
    %v718 = vpack.c.bf16 %v366, %v350
    %v719 = vpack.c.bf16 %v367, %v351
    %v720 = vpack.c.bf16 %v368, %v352
    %v721 = vpack.c.bf16 %v369, %v353
    %v722 = vpack.c.bf16 %v370, %v354
    %v723 = vpack.c.bf16 %v371, %v355
    %v724 = vpack.c.bf16 %v372, %v356
    %v725 = vpack.c.bf16 %v373, %v357
    %v726 = vpack.c.bf16 %v374, %v358
    %v727 = vpack.c.bf16 %v375, %v359
    %v728 = vpack.c.bf16 %v376, %v360
    %v729 = vpack.c.bf16 %v377, %v361
    %v730 = vpack.c.bf16 %v378, %v362
    %v731 = vpack.c.bf16 %v379, %v363
    %v732 = vpack.c.bf16 %v396, %v380
    %v733 = vpack.c.bf16 %v397, %v381
    %v734 = vpack.c.bf16 %v398, %v382
    %v735 = vpack.c.bf16 %v399, %v383
    %v736 = vpack.c.bf16 %v400, %v384
    %v737 = vpack.c.bf16 %v401, %v385
    %v738 = vpack.c.bf16 %v402, %v386
    %v739 = vpack.c.bf16 %v403, %v387
    %v740 = vpack.c.bf16 %v404, %v388
    %v741 = vpack.c.bf16 %v405, %v389
    %v742 = vpack.c.bf16 %v406, %v390
    %v743 = vpack.c.bf16 %v407, %v391
    %v744 = vpack.c.bf16 %v408, %v392
    %v745 = vpack.c.bf16 %v409, %v393
    %v746 = vpack.c.bf16 %v410, %v394
    %v747 = vpack.c.bf16 %v411, %v395
    %v748 = vpack.c.bf16 %v428, %v412
    %v749 = vpack.c.bf16 %v429, %v413
    %v750 = vpack.c.bf16 %v430, %v414
    %v751 = vpack.c.bf16 %v431, %v415
    %v752 = vpack.c.bf16 %v432, %v416
    %v753 = vpack.c.bf16 %v433, %v417
    %v754 = vpack.c.bf16 %v434, %v418
    %v755 = vpack.c.bf16 %v435, %v419
    %v756 = vpack.c.bf16 %v436, %v420
    %v757 = vpack.c.bf16 %v437, %v421
    %v758 = vpack.c.bf16 %v438, %v422
    %v759 = vpack.c.bf16 %v439, %v423
    %v760 = vpack.c.bf16 %v440, %v424
    %v761 = vpack.c.bf16 %v441, %v425
    %v762 = vpack.c.bf16 %v442, %v426
    %v763 = vpack.c.bf16 %v443, %v427
    %v764 = vpack.c.bf16 %v460, %v444
    %v765 = vpack.c.bf16 %v461, %v445
    %v766 = vpack.c.bf16 %v462, %v446
    %v767 = vpack.c.bf16 %v463, %v447
    %v768 = vpack.c.bf16 %v464, %v448
    %v769 = vpack.c.bf16 %v465, %v449
    %v770 = vpack.c.bf16 %v466, %v450
    %v771 = vpack.c.bf16 %v467, %v451
    %v772 = vpack.c.bf16 %v468, %v452
    %v773 = vpack.c.bf16 %v469, %v453
    %v774 = vpack.c.bf16 %v470, %v454
    %v775 = vpack.c.bf16 %v471, %v455
    %v776 = vpack.c.bf16 %v472, %v456
    %v777 = vpack.c.bf16 %v473, %v457
    %v778 = vpack.c.bf16 %v474, %v458
    %v779 = vpack.c.bf16 %v475, %v459
    %v780 = vpack.c.bf16 %v492, %v476
    %v781 = vpack.c.bf16 %v493, %v477
    %v782 = vpack.c.bf16 %v494, %v478
    %v783 = vpack.c.bf16 %v495, %v479
    %v784 = vpack.c.bf16 %v496, %v480
    %v785 = vpack.c.bf16 %v497, %v481
    %v786 = vpack.c.bf16 %v498, %v482
    %v787 = vpack.c.bf16 %v499, %v483
    %v788 = vpack.c.bf16 %v500, %v484
    %v789 = vpack.c.bf16 %v501, %v485
    %v790 = vpack.c.bf16 %v502, %v486
    %v791 = vpack.c.bf16 %v503, %v487
    %v792 = vpack.c.bf16 %v504, %v488
    %v793 = vpack.c.bf16 %v505, %v489
    %v794 = vpack.c.bf16 %v506, %v490
    %v795 = vpack.c.bf16 %v507, %v491
    %v796 = vpack.c.bf16 %v524, %v508
    %v797 = vpack.c.bf16 %v525, %v509
    %v798 = vpack.c.bf16 %v526, %v510
    %v799 = vpack.c.bf16 %v527, %v511
    %v800 = vpack.c.bf16 %v528, %v512
    %v801 = vpack.c.bf16 %v529, %v513
    %v802 = vpack.c.bf16 %v530, %v514
    %v803 = vpack.c.bf16 %v531, %v515
    %v804 = vpack.c.bf16 %v532, %v516
    %v805 = vpack.c.bf16 %v533, %v517
    %v806 = vpack.c.bf16 %v534, %v518
    %v807 = vpack.c.bf16 %v535, %v519
    %v808 = vpack.c.bf16 %v536, %v520
    %v809 = vpack.c.bf16 %v537, %v521
    %v810 = vpack.c.bf16 %v538, %v522
    %v811 = vpack.c.bf16 %v539, %v523
    %v812 = vpack.c.bf16 %v556, %v540
    %v813 = vpack.c.bf16 %v557, %v541
    %v814 = vpack.c.bf16 %v558, %v542
    %v815 = vpack.c.bf16 %v559, %v543
    %v816 = vpack.c.bf16 %v560, %v544
    %v817 = vpack.c.bf16 %v561, %v545
    %v818 = vpack.c.bf16 %v562, %v546
    %v819 = vpack.c.bf16 %v563, %v547
    %v820 = vpack.c.bf16 %v564, %v548
    %v821 = vpack.c.bf16 %v565, %v549
    %v822 = vpack.c.bf16 %v566, %v550
    %v823 = vpack.c.bf16 %v567, %v551
    %v824 = vpack.c.bf16 %v568, %v552
    %v825 = vpack.c.bf16 %v569, %v553
    %v826 = vpack.c.bf16 %v570, %v554
    %v827 = vpack.c.bf16 %v571, %v555
    %v828 = vld [vmem:[#allocation7] sm:$0xff]
    %v829 = vld [vmem:[#allocation7 + $0x8] sm:$0xff]
    %v832 = vlaneseq
    %v833 = vshrl.u32 %v832, 7
    %v834 = vsub.s32 0, %v833
    %v835 = vrot.slane %v828, %v834
    %v836 = vlaneseq
    %v837 = vshrl.u32 %v836, 7
    %v838 = vsub.s32 1, %v837
    %v839 = vrot.slane %v828, %v838
    %v840 = vlaneseq
    %v841 = vshrl.u32 %v840, 7
    %v842 = vsub.s32 2, %v841
    %v843 = vrot.slane %v828, %v842
    %v844 = vlaneseq
    %v845 = vshrl.u32 %v844, 7
    %v846 = vsub.s32 3, %v845
    %v847 = vrot.slane %v828, %v846
    %v848 = vlaneseq
    %v849 = vshrl.u32 %v848, 7
    %v850 = vsub.s32 4, %v849
    %v851 = vrot.slane %v828, %v850
    %v852 = vlaneseq
    %v853 = vshrl.u32 %v852, 7
    %v854 = vsub.s32 5, %v853
    %v855 = vrot.slane %v828, %v854
    %v856 = vlaneseq
    %v857 = vshrl.u32 %v856, 7
    %v858 = vsub.s32 6, %v857
    %v859 = vrot.slane %v828, %v858
    %v860 = vlaneseq
    %v861 = vshrl.u32 %v860, 7
    %v862 = vsub.s32 7, %v861
    %v863 = vrot.slane %v828, %v862
    %v864 = vlaneseq
    %v865 = vshrl.u32 %v864, 7
    %v866 = vsub.s32 0, %v865
    %v867 = vrot.slane %v829, %v866
    %v868 = vlaneseq
    %v869 = vshrl.u32 %v868, 7
    %v870 = vsub.s32 1, %v869
    %v871 = vrot.slane %v829, %v870
    %v872 = vlaneseq
    %v873 = vshrl.u32 %v872, 7
    %v874 = vsub.s32 2, %v873
    %v875 = vrot.slane %v829, %v874
    %v876 = vlaneseq
    %v877 = vshrl.u32 %v876, 7
    %v878 = vsub.s32 3, %v877
    %v879 = vrot.slane %v829, %v878
    %v880 = vlaneseq
    %v881 = vshrl.u32 %v880, 7
    %v882 = vsub.s32 4, %v881
    %v883 = vrot.slane %v829, %v882
    %v884 = vlaneseq
    %v885 = vshrl.u32 %v884, 7
    %v886 = vsub.s32 5, %v885
    %v887 = vrot.slane %v829, %v886
    %v888 = vlaneseq
    %v889 = vshrl.u32 %v888, 7
    %v890 = vsub.s32 6, %v889
    %v891 = vrot.slane %v829, %v890
    %v892 = vlaneseq
    %v893 = vshrl.u32 %v892, 7
    %v894 = vsub.s32 7, %v893
    %v895 = vrot.slane %v829, %v894
    %912 = vmatprep.subr.bf16.mxu0 %v573
    %913 = vmatpush1.bf16.msra.mxu0 %v572
    %914 = vmatprep.subr.bf16.mxu0 %v589
    %915 = vmatpush1.bf16.msra.mxu0 %v588
    %916 = vmatprep.subr.bf16.mxu0 %v605
    %917 = vmatpush1.bf16.msra.mxu0 %v604
    %918 = vmatprep.subr.bf16.mxu0 %v621
    %919 = vmatpush1.bf16.msra.mxu0 %v620
    %920 = vmatprep.subr.bf16.mxu0 %v637
    %921 = vmatpush1.bf16.msra.mxu0 %v636
    %922 = vmatprep.subr.bf16.mxu0 %v653
    %923 = vmatpush1.bf16.msra.mxu0 %v652
    %924 = vmatprep.subr.bf16.mxu0 %v669
    %925 = vmatpush1.bf16.msra.mxu0 %v668
    %926 = vmatprep.subr.bf16.mxu0 %v685
    %927 = vmatpush1.bf16.msra.mxu0 %v684
    %928 = vmatprep.subr.bf16.mxu0 %v701
    %929 = vmatpush1.bf16.msra.mxu0 %v700
    %930 = vmatprep.subr.bf16.mxu0 %v717
    %931 = vmatpush1.bf16.msra.mxu0 %v716
    %932 = vmatprep.subr.bf16.mxu0 %v733
    %933 = vmatpush1.bf16.msra.mxu0 %v732
    %934 = vmatprep.subr.bf16.mxu0 %v749
    %935 = vmatpush1.bf16.msra.mxu0 %v748
    %936 = vmatprep.subr.bf16.mxu0 %v765
    %937 = vmatpush1.bf16.msra.mxu0 %v764
    %938 = vmatprep.subr.bf16.mxu0 %v781
    %939 = vmatpush1.bf16.msra.mxu0 %v780
    %940 = vmatprep.subr.bf16.mxu0 %v797
    %941 = vmatpush1.bf16.msra.mxu0 %v796
    %942 = vmatprep.subr.bf16.mxu0 %v813
    %943 = vmatpush1.bf16.msra.mxu0 %v812
    %944 = vmatprep.mubr.bf16.mxu0 %v59
    %945 = vmatmul.mubr.bf16.gmra.mrb[0].mxu0 %v58
    %v946 = vpop.f32.mrb[0].mxu0
    %v947 = vadd.f32 %v835, %v946
    %v948 = vpop.f32.mrb[0].mxu0
    %v949 = vadd.f32 %v839, %v948
    %v950 = vpop.f32.mrb[0].mxu0
    %v951 = vadd.f32 %v835, %v950
    %v952 = vpop.f32.mrb[0].mxu0
    %v953 = vadd.f32 %v839, %v952
    %954 = vdwg.mxu0
    %955 = vmatprep.subr.bf16.mxu0 %v575
    %956 = vmatpush1.bf16.msra.mxu0 %v574
    %957 = vmatprep.subr.bf16.mxu0 %v591
    %958 = vmatpush1.bf16.msra.mxu0 %v590
    %959 = vmatprep.subr.bf16.mxu0 %v607
    %960 = vmatpush1.bf16.msra.mxu0 %v606
    %961 = vmatprep.subr.bf16.mxu0 %v623
    %962 = vmatpush1.bf16.msra.mxu0 %v622
    %963 = vmatprep.subr.bf16.mxu0 %v639
    %964 = vmatpush1.bf16.msra.mxu0 %v638
    %965 = vmatprep.subr.bf16.mxu0 %v655
    %966 = vmatpush1.bf16.msra.mxu0 %v654
    %967 = vmatprep.subr.bf16.mxu0 %v671
    %968 = vmatpush1.bf16.msra.mxu0 %v670
    %969 = vmatprep.subr.bf16.mxu0 %v687
    %970 = vmatpush1.bf16.msra.mxu0 %v686
    %971 = vmatprep.subr.bf16.mxu0 %v703
    %972 = vmatpush1.bf16.msra.mxu0 %v702
    %973 = vmatprep.subr.bf16.mxu0 %v719
    %974 = vmatpush1.bf16.msra.mxu0 %v718
    %975 = vmatprep.subr.bf16.mxu0 %v735
    %976 = vmatpush1.bf16.msra.mxu0 %v734
    %977 = vmatprep.subr.bf16.mxu0 %v751
    %978 = vmatpush1.bf16.msra.mxu0 %v750
    %979 = vmatprep.subr.bf16.mxu0 %v767
    %980 = vmatpush1.bf16.msra.mxu0 %v766
    %981 = vmatprep.subr.bf16.mxu0 %v783
    %982 = vmatpush1.bf16.msra.mxu0 %v782
    %983 = vmatprep.subr.bf16.mxu0 %v799
    %984 = vmatpush1.bf16.msra.mxu0 %v798
    %985 = vmatprep.subr.bf16.mxu0 %v815
    %986 = vmatpush1.bf16.msra.mxu0 %v814
    %987 = vmatprep.mubr.bf16.mxu0 %v59
    %988 = vmatmul.mubr.bf16.gmra.mrb[0].mxu0 %v58
    %v989 = vpop.f32.mrb[0].mxu0
    %v990 = vadd.f32 %v843, %v989
    %v991 = vpop.f32.mrb[0].mxu0
    %v992 = vadd.f32 %v847, %v991
    %v993 = vpop.f32.mrb[0].mxu0
    %v994 = vadd.f32 %v843, %v993
    %v995 = vpop.f32.mrb[0].mxu0
    %v996 = vadd.f32 %v847, %v995
    %997 = vdwg.mxu0
    %998 = vmatprep.subr.bf16.mxu0 %v577
    %999 = vmatpush1.bf16.msra.mxu0 %v576
    %1000 = vmatprep.subr.bf16.mxu0 %v593
    %1001 = vmatpush1.bf16.msra.mxu0 %v592
    %1002 = vmatprep.subr.bf16.mxu0 %v609
    %1003 = vmatpush1.bf16.msra.mxu0 %v608
    %1004 = vmatprep.subr.bf16.mxu0 %v625
    %1005 = vmatpush1.bf16.msra.mxu0 %v624
    %1006 = vmatprep.subr.bf16.mxu0 %v641
    %1007 = vmatpush1.bf16.msra.mxu0 %v640
    %1008 = vmatprep.subr.bf16.mxu0 %v657
    %1009 = vmatpush1.bf16.msra.mxu0 %v656
    %1010 = vmatprep.subr.bf16.mxu0 %v673
    %1011 = vmatpush1.bf16.msra.mxu0 %v672
    %1012 = vmatprep.subr.bf16.mxu0 %v689
    %1013 = vmatpush1.bf16.msra.mxu0 %v688
    %1014 = vmatprep.subr.bf16.mxu0 %v705
    %1015 = vmatpush1.bf16.msra.mxu0 %v704
    %1016 = vmatprep.subr.bf16.mxu0 %v721
    %1017 = vmatpush1.bf16.msra.mxu0 %v720
    %1018 = vmatprep.subr.bf16.mxu0 %v737
    %1019 = vmatpush1.bf16.msra.mxu0 %v736
    %1020 = vmatprep.subr.bf16.mxu0 %v753
    %1021 = vmatpush1.bf16.msra.mxu0 %v752
    %1022 = vmatprep.subr.bf16.mxu0 %v769
    %1023 = vmatpush1.bf16.msra.mxu0 %v768
    %1024 = vmatprep.subr.bf16.mxu0 %v785
    %1025 = vmatpush1.bf16.msra.mxu0 %v784
    %1026 = vmatprep.subr.bf16.mxu0 %v801
    %1027 = vmatpush1.bf16.msra.mxu0 %v800
    %1028 = vmatprep.subr.bf16.mxu0 %v817
    %1029 = vmatpush1.bf16.msra.mxu0 %v816
    %1030 = vmatprep.mubr.bf16.mxu0 %v59
    %1031 = vmatmul.mubr.bf16.gmra.mrb[0].mxu0 %v58
    %v1032 = vpop.f32.mrb[0].mxu0
    %v1033 = vadd.f32 %v851, %v1032
    %v1034 = vpop.f32.mrb[0].mxu0
    %v1035 = vadd.f32 %v855, %v1034
    %v1036 = vpop.f32.mrb[0].mxu0
    %v1037 = vadd.f32 %v851, %v1036
    %v1038 = vpop.f32.mrb[0].mxu0
    %v1039 = vadd.f32 %v855, %v1038
    %1040 = vdwg.mxu0
    %1041 = vmatprep.subr.bf16.mxu0 %v579
    %1042 = vmatpush1.bf16.msra.mxu0 %v578
    %1043 = vmatprep.subr.bf16.mxu0 %v595
    %1044 = vmatpush1.bf16.msra.mxu0 %v594
    %1045 = vmatprep.subr.bf16.mxu0 %v611
    %1046 = vmatpush1.bf16.msra.mxu0 %v610
    %1047 = vmatprep.subr.bf16.mxu0 %v627
    %1048 = vmatpush1.bf16.msra.mxu0 %v626
    %1049 = vmatprep.subr.bf16.mxu0 %v643
    %1050 = vmatpush1.bf16.msra.mxu0 %v642
    %1051 = vmatprep.subr.bf16.mxu0 %v659
    %1052 = vmatpush1.bf16.msra.mxu0 %v658
    %1053 = vmatprep.subr.bf16.mxu0 %v675
    %1054 = vmatpush1.bf16.msra.mxu0 %v674
    %1055 = vmatprep.subr.bf16.mxu0 %v691
    %1056 = vmatpush1.bf16.msra.mxu0 %v690
    %1057 = vmatprep.subr.bf16.mxu0 %v707
    %1058 = vmatpush1.bf16.msra.mxu0 %v706
    %1059 = vmatprep.subr.bf16.mxu0 %v723
    %1060 = vmatpush1.bf16.msra.mxu0 %v722
    %1061 = vmatprep.subr.bf16.mxu0 %v739
    %1062 = vmatpush1.bf16.msra.mxu0 %v738
    %1063 = vmatprep.subr.bf16.mxu0 %v755
    %1064 = vmatpush1.bf16.msra.mxu0 %v754
    %1065 = vmatprep.subr.bf16.mxu0 %v771
    %1066 = vmatpush1.bf16.msra.mxu0 %v770
    %1067 = vmatprep.subr.bf16.mxu0 %v787
    %1068 = vmatpush1.bf16.msra.mxu0 %v786
    %1069 = vmatprep.subr.bf16.mxu0 %v803
    %1070 = vmatpush1.bf16.msra.mxu0 %v802
    %1071 = vmatprep.subr.bf16.mxu0 %v819
    %1072 = vmatpush1.bf16.msra.mxu0 %v818
    %1073 = vmatprep.mubr.bf16.mxu0 %v59
    %1074 = vmatmul.mubr.bf16.gmra.mrb[0].mxu0 %v58
    %v1075 = vpop.f32.mrb[0].mxu0
    %v1076 = vadd.f32 %v859, %v1075
    %v1077 = vpop.f32.mrb[0].mxu0
    %v1078 = vadd.f32 %v863, %v1077
    %v1079 = vpop.f32.mrb[0].mxu0
    %v1080 = vadd.f32 %v859, %v1079
    %v1081 = vpop.f32.mrb[0].mxu0
    %v1082 = vadd.f32 %v863, %v1081
    %1083 = vdwg.mxu0
    %1084 = vmatprep.subr.bf16.mxu0 %v581
    %1085 = vmatpush1.bf16.msra.mxu0 %v580
    %1086 = vmatprep.subr.bf16.mxu0 %v597
    %1087 = vmatpush1.bf16.msra.mxu0 %v596
    %1088 = vmatprep.subr.bf16.mxu0 %v613
    %1089 = vmatpush1.bf16.msra.mxu0 %v612
    %1090 = vmatprep.subr.bf16.mxu0 %v629
    %1091 = vmatpush1.bf16.msra.mxu0 %v628
    %1092 = vmatprep.subr.bf16.mxu0 %v645
    %1093 = vmatpush1.bf16.msra.mxu0 %v644
    %1094 = vmatprep.subr.bf16.mxu0 %v661
    %1095 = vmatpush1.bf16.msra.mxu0 %v660
    %1096 = vmatprep.subr.bf16.mxu0 %v677
    %1097 = vmatpush1.bf16.msra.mxu0 %v676
    %1098 = vmatprep.subr.bf16.mxu0 %v693
    %1099 = vmatpush1.bf16.msra.mxu0 %v692
    %1100 = vmatprep.subr.bf16.mxu0 %v709
    %1101 = vmatpush1.bf16.msra.mxu0 %v708
    %1102 = vmatprep.subr.bf16.mxu0 %v725
    %1103 = vmatpush1.bf16.msra.mxu0 %v724
    %1104 = vmatprep.subr.bf16.mxu0 %v741
    %1105 = vmatpush1.bf16.msra.mxu0 %v740
    %1106 = vmatprep.subr.bf16.mxu0 %v757
    %1107 = vmatpush1.bf16.msra.mxu0 %v756
    %1108 = vmatprep.subr.bf16.mxu0 %v773
    %1109 = vmatpush1.bf16.msra.mxu0 %v772
    %1110 = vmatprep.subr.bf16.mxu0 %v789
    %1111 = vmatpush1.bf16.msra.mxu0 %v788
    %1112 = vmatprep.subr.bf16.mxu0 %v805
    %1113 = vmatpush1.bf16.msra.mxu0 %v804
    %1114 = vmatprep.subr.bf16.mxu0 %v821
    %1115 = vmatpush1.bf16.msra.mxu0 %v820
    %1116 = vmatprep.mubr.bf16.mxu0 %v59
    %1117 = vmatmul.mubr.bf16.gmra.mrb[0].mxu0 %v58
    %v1118 = vpop.f32.mrb[0].mxu0
    %v1119 = vadd.f32 %v867, %v1118
    %v1120 = vpop.f32.mrb[0].mxu0
    %v1121 = vadd.f32 %v871, %v1120
    %v1122 = vpop.f32.mrb[0].mxu0
    %v1123 = vadd.f32 %v867, %v1122
    %v1124 = vpop.f32.mrb[0].mxu0
    %v1125 = vadd.f32 %v871, %v1124
    %1126 = vdwg.mxu0
    %1127 = vmatprep.subr.bf16.mxu0 %v583
    %1128 = vmatpush1.bf16.msra.mxu0 %v582
    %1129 = vmatprep.subr.bf16.mxu0 %v599
    %1130 = vmatpush1.bf16.msra.mxu0 %v598
    %1131 = vmatprep.subr.bf16.mxu0 %v615
    %1132 = vmatpush1.bf16.msra.mxu0 %v614
    %1133 = vmatprep.subr.bf16.mxu0 %v631
    %1134 = vmatpush1.bf16.msra.mxu0 %v630
    %1135 = vmatprep.subr.bf16.mxu0 %v647
    %1136 = vmatpush1.bf16.msra.mxu0 %v646
    %1137 = vmatprep.subr.bf16.mxu0 %v663
    %1138 = vmatpush1.bf16.msra.mxu0 %v662
    %1139 = vmatprep.subr.bf16.mxu0 %v679
    %1140 = vmatpush1.bf16.msra.mxu0 %v678
    %1141 = vmatprep.subr.bf16.mxu0 %v695
    %1142 = vmatpush1.bf16.msra.mxu0 %v694
    %1143 = vmatprep.subr.bf16.mxu0 %v711
    %1144 = vmatpush1.bf16.msra.mxu0 %v710
    %1145 = vmatprep.subr.bf16.mxu0 %v727
    %1146 = vmatpush1.bf16.msra.mxu0 %v726
    %1147 = vmatprep.subr.bf16.mxu0 %v743
    %1148 = vmatpush1.bf16.msra.mxu0 %v742
    %1149 = vmatprep.subr.bf16.mxu0 %v759
    %1150 = vmatpush1.bf16.msra.mxu0 %v758
    %1151 = vmatprep.subr.bf16.mxu0 %v775
    %1152 = vmatpush1.bf16.msra.mxu0 %v774
    %1153 = vmatprep.subr.bf16.mxu0 %v791
    %1154 = vmatpush1.bf16.msra.mxu0 %v790
    %1155 = vmatprep.subr.bf16.mxu0 %v807
    %1156 = vmatpush1.bf16.msra.mxu0 %v806
    %1157 = vmatprep.subr.bf16.mxu0 %v823
    %1158 = vmatpush1.bf16.msra.mxu0 %v822
    %1159 = vmatprep.mubr.bf16.mxu0 %v59
    %1160 = vmatmul.mubr.bf16.gmra.mrb[0].mxu0 %v58
    %v1161 = vpop.f32.mrb[0].mxu0
    %v1162 = vadd.f32 %v875, %v1161
    %v1163 = vpop.f32.mrb[0].mxu0
    %v1164 = vadd.f32 %v879, %v1163
    %v1165 = vpop.f32.mrb[0].mxu0
    %v1166 = vadd.f32 %v875, %v1165
    %v1167 = vpop.f32.mrb[0].mxu0
    %v1168 = vadd.f32 %v879, %v1167
    %1169 = vdwg.mxu0
    %1170 = vmatprep.subr.bf16.mxu0 %v585
    %1171 = vmatpush1.bf16.msra.mxu0 %v584
    %1172 = vmatprep.subr.bf16.mxu0 %v601
    %1173 = vmatpush1.bf16.msra.mxu0 %v600
    %1174 = vmatprep.subr.bf16.mxu0 %v617
    %1175 = vmatpush1.bf16.msra.mxu0 %v616
    %1176 = vmatprep.subr.bf16.mxu0 %v633
    %1177 = vmatpush1.bf16.msra.mxu0 %v632
    %1178 = vmatprep.subr.bf16.mxu0 %v649
    %1179 = vmatpush1.bf16.msra.mxu0 %v648
    %1180 = vmatprep.subr.bf16.mxu0 %v665
    %1181 = vmatpush1.bf16.msra.mxu0 %v664
    %1182 = vmatprep.subr.bf16.mxu0 %v681
    %1183 = vmatpush1.bf16.msra.mxu0 %v680
    %1184 = vmatprep.subr.bf16.mxu0 %v697
    %1185 = vmatpush1.bf16.msra.mxu0 %v696
    %1186 = vmatprep.subr.bf16.mxu0 %v713
    %1187 = vmatpush1.bf16.msra.mxu0 %v712
    %1188 = vmatprep.subr.bf16.mxu0 %v729
    %1189 = vmatpush1.bf16.msra.mxu0 %v728
    %1190 = vmatprep.subr.bf16.mxu0 %v745
    %1191 = vmatpush1.bf16.msra.mxu0 %v744
    %1192 = vmatprep.subr.bf16.mxu0 %v761
    %1193 = vmatpush1.bf16.msra.mxu0 %v760
    %1194 = vmatprep.subr.bf16.mxu0 %v777
    %1195 = vmatpush1.bf16.msra.mxu0 %v776
    %1196 = vmatprep.subr.bf16.mxu0 %v793
    %1197 = vmatpush1.bf16.msra.mxu0 %v792
    %1198 = vmatprep.subr.bf16.mxu0 %v809
    %1199 = vmatpush1.bf16.msra.mxu0 %v808
    %1200 = vmatprep.subr.bf16.mxu0 %v825
    %1201 = vmatpush1.bf16.msra.mxu0 %v824
    %1202 = vmatprep.mubr.bf16.mxu0 %v59
    %1203 = vmatmul.mubr.bf16.gmra.mrb[0].mxu0 %v58
    %v1204 = vpop.f32.mrb[0].mxu0
    %v1205 = vadd.f32 %v883, %v1204
    %v1206 = vpop.f32.mrb[0].mxu0
    %v1207 = vadd.f32 %v887, %v1206
    %v1208 = vpop.f32.mrb[0].mxu0
    %v1209 = vadd.f32 %v883, %v1208
    %v1210 = vpop.f32.mrb[0].mxu0
    %v1211 = vadd.f32 %v887, %v1210
    %1212 = vdwg.mxu0
    %1213 = vmatprep.subr.bf16.mxu0 %v587
    %1214 = vmatpush1.bf16.msra.mxu0 %v586
    %1215 = vmatprep.subr.bf16.mxu0 %v603
    %1216 = vmatpush1.bf16.msra.mxu0 %v602
    %1217 = vmatprep.subr.bf16.mxu0 %v619
    %1218 = vmatpush1.bf16.msra.mxu0 %v618
    %1219 = vmatprep.subr.bf16.mxu0 %v635
    %1220 = vmatpush1.bf16.msra.mxu0 %v634
    %1221 = vmatprep.subr.bf16.mxu0 %v651
    %1222 = vmatpush1.bf16.msra.mxu0 %v650
    %1223 = vmatprep.subr.bf16.mxu0 %v667
    %1224 = vmatpush1.bf16.msra.mxu0 %v666
    %1225 = vmatprep.subr.bf16.mxu0 %v683
    %1226 = vmatpush1.bf16.msra.mxu0 %v682
    %1227 = vmatprep.subr.bf16.mxu0 %v699
    %1228 = vmatpush1.bf16.msra.mxu0 %v698
    %1229 = vmatprep.subr.bf16.mxu0 %v715
    %1230 = vmatpush1.bf16.msra.mxu0 %v714
    %1231 = vmatprep.subr.bf16.mxu0 %v731
    %1232 = vmatpush1.bf16.msra.mxu0 %v730
    %1233 = vmatprep.subr.bf16.mxu0 %v747
    %1234 = vmatpush1.bf16.msra.mxu0 %v746
    %1235 = vmatprep.subr.bf16.mxu0 %v763
    %1236 = vmatpush1.bf16.msra.mxu0 %v762
    %1237 = vmatprep.subr.bf16.mxu0 %v779
    %1238 = vmatpush1.bf16.msra.mxu0 %v778
    %1239 = vmatprep.subr.bf16.mxu0 %v795
    %1240 = vmatpush1.bf16.msra.mxu0 %v794
    %1241 = vmatprep.subr.bf16.mxu0 %v811
    %1242 = vmatpush1.bf16.msra.mxu0 %v810
    %1243 = vmatprep.subr.bf16.mxu0 %v827
    %1244 = vmatpush1.bf16.msra.mxu0 %v826
    %1245 = vmatprep.mubr.bf16.mxu0 %v59
    %1246 = vmatmul.mubr.bf16.gmra.mrb[0].mxu0 %v58
    %v1247 = vpop.f32.mrb[0].mxu0
    %v1248 = vadd.f32 %v891, %v1247
    %v1249 = vpop.f32.mrb[0].mxu0
    %v1250 = vadd.f32 %v895, %v1249
    %v1251 = vpop.f32.mrb[0].mxu0
    %v1252 = vadd.f32 %v891, %v1251
    %v1253 = vpop.f32.mrb[0].mxu0
    %v1254 = vadd.f32 %v895, %v1253
    %1255 = vdwg.mxu0
    %1256 = vst [vmem:[#allocation8] sm:$0xff] %v947
    %1257 = vst [vmem:[#allocation8 + $0x8] sm:$0xff] %v949
    %1258 = vst [vmem:[#allocation8 + $0x10] sm:$0xff] %v990
    %1259 = vst [vmem:[#allocation8 + $0x18] sm:$0xff] %v992
    %1260 = vst [vmem:[#allocation8 + $0x20] sm:$0xff] %v1033
    %1261 = vst [vmem:[#allocation8 + $0x28] sm:$0xff] %v1035
    %1262 = vst [vmem:[#allocation8 + $0x30] sm:$0xff] %v1076
    %1263 = vst [vmem:[#allocation8 + $0x38] sm:$0xff] %v1078
    %1264 = vst [vmem:[#allocation8 + $0x40] sm:$0xff] %v1119
    %1265 = vst [vmem:[#allocation8 + $0x48] sm:$0xff] %v1121
    %1266 = vst [vmem:[#allocation8 + $0x50] sm:$0xff] %v1162
    %1267 = vst [vmem:[#allocation8 + $0x58] sm:$0xff] %v1164
    %1268 = vst [vmem:[#allocation8 + $0x60] sm:$0xff] %v1205
    %1269 = vst [vmem:[#allocation8 + $0x68] sm:$0xff] %v1207
    %1270 = vst [vmem:[#allocation8 + $0x70] sm:$0xff] %v1248
    %1271 = vst [vmem:[#allocation8 + $0x78] sm:$0xff] %v1250
    %1272 = vst [vmem:[#allocation8 + $0x80] sm:$0xff] %v951
    %1273 = vst [vmem:[#allocation8 + $0x88] sm:$0xff] %v953
    %1274 = vst [vmem:[#allocation8 + $0x90] sm:$0xff] %v994
    %1275 = vst [vmem:[#allocation8 + $0x98] sm:$0xff] %v996
    %1276 = vst [vmem:[#allocation8 + $0xa0] sm:$0xff] %v1037
    %1277 = vst [vmem:[#allocation8 + $0xa8] sm:$0xff] %v1039
    %1278 = vst [vmem:[#allocation8 + $0xb0] sm:$0xff] %v1080
    %1279 = vst [vmem:[#allocation8 + $0xb8] sm:$0xff] %v1082
    %1280 = vst [vmem:[#allocation8 + $0xc0] sm:$0xff] %v1123
    %1281 = vst [vmem:[#allocation8 + $0xc8] sm:$0xff] %v1125
    %1282 = vst [vmem:[#allocation8 + $0xd0] sm:$0xff] %v1166
    %1283 = vst [vmem:[#allocation8 + $0xd8] sm:$0xff] %v1168
    %1284 = vst [vmem:[#allocation8 + $0xe0] sm:$0xff] %v1209
    %1285 = vst [vmem:[#allocation8 + $0xe8] sm:$0xff] %v1211
    %1286 = vst [vmem:[#allocation8 + $0xf0] sm:$0xff] %v1252
    %1287 = vst [vmem:[#allocation8 + $0xf8] sm:$0xff] %v1254
    // Predicated region
    $region26: #{tpu_custom_call.1} parent=1 // pred_check
      _
    $region27: #{tpu_custom_call.1} parent=1 // pred_check_branch
      %1289 = sbr.rel (0) target = $region29
    $region28: #{tpu_custom_call.1} parent=1 // pred_region
      %s1291 = ssub.s32 4096, 4096
      %1292 = vsyncadd [#allocation4], %s1291
      %s1293 = sshll.u32 [#allocation8], 4
      %s1294 = int_to_ptr.vmem [resolvable:$true] %s1293
      %1299 = dma.vmem_to_hbm [thread:$0]  %s1294, 4096, %s3, [#allocation4], 2048, 2048, 128
    $region29: #{tpu_custom_call.1} parent=1 // pred_fallthru
      _
    // Predicated region
    $region30: #{tpu_custom_call.1} parent=1 // pred_check
      _
    $region31: #{tpu_custom_call.1} parent=1 // pred_check_branch
      %1301 = sbr.rel (0) target = $region33
    $region32: #{tpu_custom_call.1} parent=1 // pred_region
      %1302 = dma.done [#allocation4], 4096
    $region33: #{tpu_custom_call.1} parent=1 // pred_fallthru
      _
    %1303 = vsyncpa [#allocation3], 1
    %1304 = vsyncpa [#allocation6], 1
    %1305 = vsyncpa [#allocation4], 1

</llo_original>
